<compile_context>
chip_gen: v7x
topology: tpu7x:2x2x1
jax: 0.10.0
libtpu: 0.0.40
codegen_flags: <defaults>
</compile_context>

<pallas_src>
import functools
import math

import jax
import jax.numpy as jnp
import numpy as np
from jax.experimental import pallas as pl
from jax.experimental.pallas import tpu as pltpu

# ----------------------------- model config (small, consistent with module) --
LOC_SIZE = 128      # vocabulary of locations (lane-dense logits & gate width)
EMBED_DIM = 32
HIDDEN_SIZE = 32    # 4*H = 128 -> lane-dense gate matmuls
NUM_LAYERS = 2
OUTPUT_SIZE = 8     # out[:, -output_size:, :]
BATCH = 2
SEQ_LEN = 12        # must be >= OUTPUT_SIZE


# ----------------------------- packed weight-slab layout ---------------------
def _slab_layout():
    """Row layout of the single packed (rows, 128) f32 weight slab.

    Every piece has a 128-wide last dim (4*H == LOC_SIZE == 128).  Starts are
    rounded up to a multiple of 8 so all static in-kernel slices are
    sublane-tile aligned.
    """
    H, E = HIDDEN_SIZE, EMBED_DIM

    def rnd8(x):
        return (x + 7) // 8 * 8

    layout = {}
    r = 0

    def add(name, n):
        nonlocal r
        layout[name] = (r, n)
        r = rnd8(r + n)

    add("wih0", E)            # layer-0 input->gates (E, 4H), g-cols pre-scaled
    add("whh0", H)            # layer-0 hidden->gates (H, 4H)
    add("b0", 1)              # layer-0 b_ih + b_hh (1, 4H)
    for l in range(1, NUM_LAYERS):
        add(f"wstack{l}", 2 * H)   # stacked [W_ih; W_hh] (2H, 4H)
        add(f"b{l}", 1)
    add("fcw", H)             # fc weight (H, LOC)
    add("fcb", 1)             # fc bias (1, LOC)
    return layout, r


# ----------------------------- fused Pallas kernel ---------------------------
def fused_lstm_kernel(tok_ref, emb_ref, w_ref, out_ref, *,
                      batch, num_layers, output_size, hidden, embed_dim,
                      layout):
    """Whole forward pass, gridless (single invocation).

      tok_ref : (T*B, 1) int32   time-major flattened tokens (row = t*B + b)
      emb_ref : (LOC, E) f32     embedding table
      w_ref   : (rows, 128) f32  packed weight slab (see _slab_layout)
      out_ref : (O*B, LOC) f32   time-major logits of the last O steps
    """
    H = hidden
    tb = tok_ref.shape[0]
    seq_len = tb // batch
    loc = emb_ref.shape[0]

    def piece(name):
        off, n = layout[name]
        return w_ref[off:off + n, :]

    # ---- Embedding lookup as a one-hot matmul on the MXU (exact) -----------
    lane = jax.lax.broadcasted_iota(jnp.int32, (tb, loc), 1)
    onehot = (lane == tok_ref[...]).astype(jnp.float32)              # (T*B, LOC)
    x_all = jnp.dot(onehot, emb_ref[...],
                    preferred_element_type=jnp.float32)              # (T*B, E)

    # ---- Layer-0 input projection for ALL timesteps (off the serial chain) -
    gx0 = (jnp.dot(x_all, piece("wih0")[:embed_dim, :],
                   preferred_element_type=jnp.float32)
           + piece("b0"))                                            # (T*B, 4H)

    # ---- Recurrent weights: one-time bf16 cast (off the serial chain) ------
    w_hh0 = piece("whh0").astype(jnp.bfloat16)                       # (H, 4H)
    w_stack = [None] * num_layers
    bias = [None] * num_layers
    for l in range(1, num_layers):
        w_stack[l] = piece(f"wstack{l}").astype(jnp.bfloat16)        # (2H, 4H)
        bias[l] = piece(f"b{l}")                                     # (1, 4H)

    # ---- Wavefront recurrence: layer l runs time t = s - l at step s -------
    zeros = jnp.zeros((batch, H), jnp.float32)
    h = [zeros] * num_layers
    c = [zeros] * num_layers
    h_bf = [zeros.astype(jnp.bfloat16)] * num_layers
    last = []                       # last-layer h for the final output_size steps

    for s in range(seq_len + num_layers - 1):
        nh, nc, nhb = list(h), list(c), list(h_bf)
        for l in range(num_layers):
            t = s - l
            if t < 0 or t >= seq_len:
                continue
            if l == 0:
                gates = (gx0[t * batch:(t + 1) * batch, :]
                         + jnp.dot(h_bf[0], w_hh0,
                                   preferred_element_type=jnp.float32))
            else:
                # fused input+recurrent projection: [h_{l-1,t}, h_{l,t-1}] @ Wstack
                inp = jnp.concatenate([h_bf[l - 1], h_bf[l]], axis=1)  # (B, 2H)
                gates = (jnp.dot(inp, w_stack[l],
                                 preferred_element_type=jnp.float32)
                         + bias[l])
            # Single full-vreg tanh: g-columns were pre-scaled x2, so
            # y[g] = tanh(x_g) and sigmoid(x) = 0.5*(1 + tanh(x/2)) for i/f/o.
            y = jnp.tanh(0.5 * gates)                                  # (B, 4H)
            ifo = 0.5 * (y + 1.0)
            c_new = ifo[:, H:2 * H] * c[l] + ifo[:, 0:H] * y[:, 2 * H:3 * H]
            h_new = ifo[:, 3 * H:4 * H] * jnp.tanh(c_new)
            nh[l], nc[l], nhb[l] = h_new, c_new, h_new.astype(jnp.bfloat16)
            if l == num_layers - 1 and t >= seq_len - output_size:
                last.append(h_new)
        h, c, h_bf = nh, nc, nhb

    # ---- last `output_size` steps -> Linear, one lane-dense (O*B, LOC) store
    h_last = jnp.concatenate(last, axis=0)                            # (O*B, H)
    out_ref[...] = (jnp.dot(h_last, piece("fcw"),
                            preferred_element_type=jnp.float32)
                    + piece("fcb"))


# ----------------------------- wrappers --------------------------------------
def prepare_params(params):
    """One-time weight prep: transpose, sum biases, pre-scale the g-gate
    columns by 2 (for the single-tanh trick) and pack everything into one
    (rows, 128) f32 slab."""
    H = HIDDEN_SIZE
    assert 4 * H == LOC_SIZE, "packed slab assumes 4*H == LOC_SIZE (128 lanes)"

    def scale_g(a):
        a = jnp.asarray(a, jnp.float32)
        return a.at[..., 2 * H:3 * H].multiply(2.0)

    layers = params["lstm"]
    pieces = {
        "wih0": scale_g(jnp.transpose(layers[0]["w_ih"])),            # (E, 4H)
        "whh0": scale_g(jnp.transpose(layers[0]["w_hh"])),            # (H, 4H)
        "b0": scale_g((layers[0]["b_ih"] + layers[0]["b_hh"])[None, :]),
        "fcw": jnp.asarray(jnp.transpose(params["fc_w"]), jnp.float32),  # (H, LOC)
        "fcb": jnp.asarray(params["fc_b"][None, :], jnp.float32),
    }
    for l in range(1, NUM_LAYERS):
        pieces[f"wstack{l}"] = scale_g(
            jnp.concatenate([jnp.transpose(layers[l]["w_ih"]),
                             jnp.transpose(layers[l]["w_hh"])], axis=0))  # (2H, 4H)
        pieces[f"b{l}"] = scale_g((layers[l]["b_ih"] + layers[l]["b_hh"])[None, :])

    layout, total_rows = _slab_layout()
    slab = jnp.zeros((total_rows, LOC_SIZE), jnp.float32)
    for name, (off, n) in layout.items():
        slab = slab.at[off:off + n, :].set(pieces[name])

    return {"embedding": jnp.asarray(params["embedding"], jnp.float32),
            "slab": slab}


@jax.jit
def lstm_model_forward(tokens, embedding, slab):
    """tokens: (B, T) int32 -> logits (B, OUTPUT_SIZE, LOC_SIZE) float32."""
    B, T = tokens.shape
    layout, _ = _slab_layout()

    # time-major flattened tokens: row index = t*B + b
    tok_tm = jnp.swapaxes(tokens, 0, 1).reshape(T * B, 1)

    kernel = functools.partial(
        fused_lstm_kernel, batch=B, num_layers=NUM_LAYERS,
        output_size=OUTPUT_SIZE, hidden=HIDDEN_SIZE, embed_dim=EMBED_DIM,
        layout=layout)

    logits_tm = pl.pallas_call(
        kernel,
        out_shape=jax.ShapeDtypeStruct((OUTPUT_SIZE * B, LOC_SIZE), jnp.float32),
        # gridless: 3 operands, whole arrays resident in VMEM (tiny footprint)
        in_specs=[pl.BlockSpec(memory_space=pltpu.MemorySpace.VMEM)] * 3,
        out_specs=pl.BlockSpec(memory_space=pltpu.MemorySpace.VMEM),
    )(tok_tm, embedding, slab)

    # time-major (O*B, LOC) -> (B, O, LOC)
    return jnp.swapaxes(logits_tm.reshape(OUTPUT_SIZE, B, LOC_SIZE), 0, 1)


# ----------------------------- pure-JAX reference ----------------------------
def _lstm_layer_ref(x, w_ih, w_hh, b_ih, b_hh):
    B = x.shape[0]
    H = w_hh.shape[1]

    def step(carry, x_t):
        h, c = carry
        gates = x_t @ w_ih.T + b_ih + h @ w_hh.T + b_hh
        i, f, g, o = jnp.split(gates, 4, axis=-1)
        i, f, o = jax.nn.sigmoid(i), jax.nn.sigmoid(f), jax.nn.sigmoid(o)
        g = jnp.tanh(g)
        c = f * c + i * g
        h = o * jnp.tanh(c)
        return (h, c), h

    init = (jnp.zeros((B, H), jnp.float32), jnp.zeros((B, H), jnp.float32))
    _, hs = jax.lax.scan(step, init, jnp.swapaxes(x, 0, 1))
    return jnp.swapaxes(hs, 0, 1)


def lstm_model_reference(tokens, params):
    x = jnp.take(params["embedding"], tokens, axis=0)
    for layer in params["lstm"]:
        x = _lstm_layer_ref(x, layer["w_ih"], layer["w_hh"],
                            layer["b_ih"], layer["b_hh"])
    out = x[:, -OUTPUT_SIZE:, :]
    return out @ params["fc_w"].T + params["fc_b"]


# ----------------------------- parameter init --------------------------------
def init_params(key):
    k = 1.0 / math.sqrt(HIDDEN_SIZE)
    keys = jax.random.split(key, 3 + 4 * NUM_LAYERS)
    params = {
        "embedding": jax.random.normal(keys[0], (LOC_SIZE, EMBED_DIM),
                                       jnp.float32),
        "fc_w": jax.random.uniform(keys[1], (LOC_SIZE, HIDDEN_SIZE),
                                   jnp.float32, -k, k),
        "fc_b": jax.random.uniform(keys[2], (LOC_SIZE,), jnp.float32, -k, k),
        "lstm": [],
    }
    for l in range(NUM_LAYERS):
        in_dim = EMBED_DIM if l == 0 else HIDDEN_SIZE
        kk = keys[3 + 4 * l: 3 + 4 * (l + 1)]
        params["lstm"].append({
            "w_ih": jax.random.uniform(kk[0], (4 * HIDDEN_SIZE, in_dim),
                                       jnp.float32, -k, k),
            "w_hh": jax.random.uniform(kk[1], (4 * HIDDEN_SIZE, HIDDEN_SIZE),
                                       jnp.float32, -k, k),
            "b_ih": jax.random.uniform(kk[2], (4 * HIDDEN_SIZE,),
                                       jnp.float32, -k, k),
            "b_hh": jax.random.uniform(kk[3], (4 * HIDDEN_SIZE,),
                                       jnp.float32, -k, k),
        })
    return params


# ----------------------------- main -------------------------------------------
if __name__ == "__main__":
    root = jax.random.PRNGKey(0)
    k_param, k_tok = jax.random.split(root)
    params = init_params(k_param)
    tokens = jax.random.randint(k_tok, (BATCH, SEQ_LEN), 0, LOC_SIZE,
                                dtype=jnp.int32)

    prep = prepare_params(params)          # one-time weight prep (hoisted)
    out = lstm_model_forward(tokens, prep["embedding"], prep["slab"])
    out = jax.block_until_ready(out)
    assert out.shape == (BATCH, OUTPUT_SIZE, LOC_SIZE), out.shape

    ref = jax.block_until_ready(lstm_model_reference(tokens, params))
    # tolerance relaxed vs. the pure-f32 version because the recurrent matmul
    # inputs are bf16 (f32 accumulation) per the perf review.
    np.testing.assert_allclose(np.asarray(out), np.asarray(ref),
                               rtol=1e-2, atol=1e-2)

    print("KERNEL_OK")
</pallas_src>

<mosaic_0001>
module attributes {stable_mosaic.version = 11 : i64} {
  func.func @fused_lstm_kernel(%arg0: memref<24x1xi32, #tpu.memory_space<vmem>>, %arg1: memref<128x32xf32, #tpu.memory_space<vmem>>, %arg2: memref<184x128xf32, #tpu.memory_space<vmem>>, %arg3: memref<16x128xf32, #tpu.memory_space<vmem>>) attributes {dimension_semantics = [], scalar_prefetch = 0 : i64, scratch_operands = 0 : i64, tpu.core_type = #tpu.core_type<tc>} {
    %0 = tpu.iota {dimensions = array<i32: 1>} : vector<24x128xi32>
    %c0 = arith.constant 0 : index
    %c0_0 = arith.constant 0 : index
    %1 = vector.load %arg0[%c0, %c0_0] : memref<24x1xi32, #tpu.memory_space<vmem>>, vector<24x1xi32>
    %2 = vector.broadcast %1 : vector<24x1xi32> to vector<24x128xi32>
    %3 = arith.cmpi eq, %0, %2 : vector<24x128xi32>
    %4 = arith.extui %3 : vector<24x128xi1> to vector<24x128xi32>
    %5 = arith.sitofp %4 : vector<24x128xi32> to vector<24x128xf32>
    %c0_1 = arith.constant 0 : index
    %c0_2 = arith.constant 0 : index
    %6 = vector.load %arg1[%c0_1, %c0_2] : memref<128x32xf32, #tpu.memory_space<vmem>>, vector<128x32xf32>
    %cst = arith.constant dense<0.000000e+00> : vector<24x32xf32>
    %7 = tpu.matmul %5, %6, %cst {dimension_numbers = #tpu.dot_dimension_numbers<[1], [0], [0], [1], [0, 0, 1, 1], [], []>} : vector<24x128xf32>, vector<128x32xf32>, vector<24x32xf32> -> vector<24x32xf32>
    %c0_3 = arith.constant 0 : index
    %c0_4 = arith.constant 0 : index
    %8 = vector.load %arg2[%c0_3, %c0_4] : memref<184x128xf32, #tpu.memory_space<vmem>>, vector<32x128xf32>
    %cst_5 = arith.constant dense<0.000000e+00> : vector<24x128xf32>
    %9 = tpu.matmul %7, %8, %cst_5 {dimension_numbers = #tpu.dot_dimension_numbers<[1], [0], [0], [1], [0, 0, 1, 1], [], []>} : vector<24x32xf32>, vector<32x128xf32>, vector<24x128xf32> -> vector<24x128xf32>
    %c64 = arith.constant 64 : index
    %c0_6 = arith.constant 0 : index
    %10 = vector.load %arg2[%c64, %c0_6] : memref<184x128xf32, #tpu.memory_space<vmem>>, vector<1x128xf32>
    %11 = vector.broadcast %10 : vector<1x128xf32> to vector<24x128xf32>
    %12 = arith.addf %9, %11 : vector<24x128xf32>
    %c32 = arith.constant 32 : index
    %c0_7 = arith.constant 0 : index
    %13 = vector.load %arg2[%c32, %c0_7] : memref<184x128xf32, #tpu.memory_space<vmem>>, vector<32x128xf32>
    %14 = arith.truncf %13 : vector<32x128xf32> to vector<32x128xbf16>
    %c72 = arith.constant 72 : index
    %c0_8 = arith.constant 0 : index
    %15 = vector.load %arg2[%c72, %c0_8] : memref<184x128xf32, #tpu.memory_space<vmem>>, vector<64x128xf32>
    %16 = arith.truncf %15 : vector<64x128xf32> to vector<64x128xbf16>
    %c136 = arith.constant 136 : index
    %c0_9 = arith.constant 0 : index
    %17 = vector.load %arg2[%c136, %c0_9] : memref<184x128xf32, #tpu.memory_space<vmem>>, vector<1x128xf32>
    %cst_10 = arith.constant 0.000000e+00 : f32
    %18 = vector.broadcast %cst_10 : f32 to vector<2x32xf32>
    %19 = arith.truncf %18 : vector<2x32xf32> to vector<2x32xbf16>
    %20 = vector.extract_strided_slice %12 {offsets = [0, 0], sizes = [2, 128], strides = [1, 1]} : vector<24x128xf32> to vector<2x128xf32>
    %cst_11 = arith.constant dense<0.000000e+00> : vector<2x128xf32>
    %21 = tpu.matmul %19, %14, %cst_11 {dimension_numbers = #tpu.dot_dimension_numbers<[1], [0], [0], [1], [0, 0, 1, 1], [], []>} : vector<2x32xbf16>, vector<32x128xbf16>, vector<2x128xf32> -> vector<2x128xf32>
    %22 = arith.addf %20, %21 : vector<2x128xf32>
    %cst_12 = arith.constant 5.000000e-01 : f32
    %23 = vector.broadcast %cst_12 : f32 to vector<2x128xf32>
    %24 = arith.mulf %23, %22 : vector<2x128xf32>
    %25 = math.tanh %24 : vector<2x128xf32>
    %cst_13 = arith.constant 1.000000e+00 : f32
    %26 = vector.broadcast %cst_13 : f32 to vector<2x128xf32>
    %27 = arith.addf %25, %26 : vector<2x128xf32>
    %cst_14 = arith.constant 5.000000e-01 : f32
    %28 = vector.broadcast %cst_14 : f32 to vector<2x128xf32>
    %29 = arith.mulf %28, %27 : vector<2x128xf32>
    %30 = vector.extract_strided_slice %29 {offsets = [0, 32], sizes = [2, 32], strides = [1, 1]} : vector<2x128xf32> to vector<2x32xf32>
    %31 = arith.mulf %30, %18 : vector<2x32xf32>
    %32 = vector.extract_strided_slice %29 {offsets = [0, 0], sizes = [2, 32], strides = [1, 1]} : vector<2x128xf32> to vector<2x32xf32>
    %33 = vector.extract_strided_slice %25 {offsets = [0, 64], sizes = [2, 32], strides = [1, 1]} : vector<2x128xf32> to vector<2x32xf32>
    %34 = arith.mulf %32, %33 : vector<2x32xf32>
    %35 = arith.addf %31, %34 : vector<2x32xf32>
    %36 = vector.extract_strided_slice %29 {offsets = [0, 96], sizes = [2, 32], strides = [1, 1]} : vector<2x128xf32> to vector<2x32xf32>
    %37 = math.tanh %35 : vector<2x32xf32>
    %38 = arith.mulf %36, %37 : vector<2x32xf32>
    %39 = arith.truncf %38 : vector<2x32xf32> to vector<2x32xbf16>
    %40 = vector.extract_strided_slice %12 {offsets = [2, 0], sizes = [2, 128], strides = [1, 1]} : vector<24x128xf32> to vector<2x128xf32>
    %cst_15 = arith.constant dense<0.000000e+00> : vector<2x128xf32>
    %41 = tpu.matmul %39, %14, %cst_15 {dimension_numbers = #tpu.dot_dimension_numbers<[1], [0], [0], [1], [0, 0, 1, 1], [], []>} : vector<2x32xbf16>, vector<32x128xbf16>, vector<2x128xf32> -> vector<2x128xf32>
    %42 = arith.addf %40, %41 : vector<2x128xf32>
    %cst_16 = arith.constant 5.000000e-01 : f32
    %43 = vector.broadcast %cst_16 : f32 to vector<2x128xf32>
    %44 = arith.mulf %43, %42 : vector<2x128xf32>
    %45 = math.tanh %44 : vector<2x128xf32>
    %cst_17 = arith.constant 1.000000e+00 : f32
    %46 = vector.broadcast %cst_17 : f32 to vector<2x128xf32>
    %47 = arith.addf %45, %46 : vector<2x128xf32>
    %cst_18 = arith.constant 5.000000e-01 : f32
    %48 = vector.broadcast %cst_18 : f32 to vector<2x128xf32>
    %49 = arith.mulf %48, %47 : vector<2x128xf32>
    %50 = vector.extract_strided_slice %49 {offsets = [0, 32], sizes = [2, 32], strides = [1, 1]} : vector<2x128xf32> to vector<2x32xf32>
    %51 = arith.mulf %50, %35 : vector<2x32xf32>
    %52 = vector.extract_strided_slice %49 {offsets = [0, 0], sizes = [2, 32], strides = [1, 1]} : vector<2x128xf32> to vector<2x32xf32>
    %53 = vector.extract_strided_slice %45 {offsets = [0, 64], sizes = [2, 32], strides = [1, 1]} : vector<2x128xf32> to vector<2x32xf32>
    %54 = arith.mulf %52, %53 : vector<2x32xf32>
    %55 = arith.addf %51, %54 : vector<2x32xf32>
    %56 = vector.extract_strided_slice %49 {offsets = [0, 96], sizes = [2, 32], strides = [1, 1]} : vector<2x128xf32> to vector<2x32xf32>
    %57 = math.tanh %55 : vector<2x32xf32>
    %58 = arith.mulf %56, %57 : vector<2x32xf32>
    %59 = arith.truncf %58 : vector<2x32xf32> to vector<2x32xbf16>
    %60 = tpu.concatenate %39, %19 in 1 : vector<2x32xbf16>, vector<2x32xbf16> -> vector<2x64xbf16>
    %cst_19 = arith.constant dense<0.000000e+00> : vector<2x128xf32>
    %61 = tpu.matmul %60, %16, %cst_19 {dimension_numbers = #tpu.dot_dimension_numbers<[1], [0], [0], [1], [0, 0, 1, 1], [], []>} : vector<2x64xbf16>, vector<64x128xbf16>, vector<2x128xf32> -> vector<2x128xf32>
    %62 = vector.broadcast %17 : vector<1x128xf32> to vector<2x128xf32>
    %63 = arith.addf %61, %62 : vector<2x128xf32>
    %cst_20 = arith.constant 5.000000e-01 : f32
    %64 = vector.broadcast %cst_20 : f32 to vector<2x128xf32>
    %65 = arith.mulf %64, %63 : vector<2x128xf32>
    %66 = math.tanh %65 : vector<2x128xf32>
    %cst_21 = arith.constant 1.000000e+00 : f32
    %67 = vector.broadcast %cst_21 : f32 to vector<2x128xf32>
    %68 = arith.addf %66, %67 : vector<2x128xf32>
    %cst_22 = arith.constant 5.000000e-01 : f32
    %69 = vector.broadcast %cst_22 : f32 to vector<2x128xf32>
    %70 = arith.mulf %69, %68 : vector<2x128xf32>
    %71 = vector.extract_strided_slice %70 {offsets = [0, 32], sizes = [2, 32], strides = [1, 1]} : vector<2x128xf32> to vector<2x32xf32>
    %72 = arith.mulf %71, %18 : vector<2x32xf32>
    %73 = vector.extract_strided_slice %70 {offsets = [0, 0], sizes = [2, 32], strides = [1, 1]} : vector<2x128xf32> to vector<2x32xf32>
    %74 = vector.extract_strided_slice %66 {offsets = [0, 64], sizes = [2, 32], strides = [1, 1]} : vector<2x128xf32> to vector<2x32xf32>
    %75 = arith.mulf %73, %74 : vector<2x32xf32>
    %76 = arith.addf %72, %75 : vector<2x32xf32>
    %77 = vector.extract_strided_slice %70 {offsets = [0, 96], sizes = [2, 32], strides = [1, 1]} : vector<2x128xf32> to vector<2x32xf32>
    %78 = math.tanh %76 : vector<2x32xf32>
    %79 = arith.mulf %77, %78 : vector<2x32xf32>
    %80 = arith.truncf %79 : vector<2x32xf32> to vector<2x32xbf16>
    %81 = vector.extract_strided_slice %12 {offsets = [4, 0], sizes = [2, 128], strides = [1, 1]} : vector<24x128xf32> to vector<2x128xf32>
    %cst_23 = arith.constant dense<0.000000e+00> : vector<2x128xf32>
    %82 = tpu.matmul %59, %14, %cst_23 {dimension_numbers = #tpu.dot_dimension_numbers<[1], [0], [0], [1], [0, 0, 1, 1], [], []>} : vector<2x32xbf16>, vector<32x128xbf16>, vector<2x128xf32> -> vector<2x128xf32>
    %83 = arith.addf %81, %82 : vector<2x128xf32>
    %cst_24 = arith.constant 5.000000e-01 : f32
    %84 = vector.broadcast %cst_24 : f32 to vector<2x128xf32>
    %85 = arith.mulf %84, %83 : vector<2x128xf32>
    %86 = math.tanh %85 : vector<2x128xf32>
    %cst_25 = arith.constant 1.000000e+00 : f32
    %87 = vector.broadcast %cst_25 : f32 to vector<2x128xf32>
    %88 = arith.addf %86, %87 : vector<2x128xf32>
    %cst_26 = arith.constant 5.000000e-01 : f32
    %89 = vector.broadcast %cst_26 : f32 to vector<2x128xf32>
    %90 = arith.mulf %89, %88 : vector<2x128xf32>
    %91 = vector.extract_strided_slice %90 {offsets = [0, 32], sizes = [2, 32], strides = [1, 1]} : vector<2x128xf32> to vector<2x32xf32>
    %92 = arith.mulf %91, %55 : vector<2x32xf32>
    %93 = vector.extract_strided_slice %90 {offsets = [0, 0], sizes = [2, 32], strides = [1, 1]} : vector<2x128xf32> to vector<2x32xf32>
    %94 = vector.extract_strided_slice %86 {offsets = [0, 64], sizes = [2, 32], strides = [1, 1]} : vector<2x128xf32> to vector<2x32xf32>
    %95 = arith.mulf %93, %94 : vector<2x32xf32>
    %96 = arith.addf %92, %95 : vector<2x32xf32>
    %97 = vector.extract_strided_slice %90 {offsets = [0, 96], sizes = [2, 32], strides = [1, 1]} : vector<2x128xf32> to vector<2x32xf32>
    %98 = math.tanh %96 : vector<2x32xf32>
    %99 = arith.mulf %97, %98 : vector<2x32xf32>
    %100 = arith.truncf %99 : vector<2x32xf32> to vector<2x32xbf16>
    %101 = tpu.concatenate %59, %80 in 1 : vector<2x32xbf16>, vector<2x32xbf16> -> vector<2x64xbf16>
    %cst_27 = arith.constant dense<0.000000e+00> : vector<2x128xf32>
    %102 = tpu.matmul %101, %16, %cst_27 {dimension_numbers = #tpu.dot_dimension_numbers<[1], [0], [0], [1], [0, 0, 1, 1], [], []>} : vector<2x64xbf16>, vector<64x128xbf16>, vector<2x128xf32> -> vector<2x128xf32>
    %103 = vector.broadcast %17 : vector<1x128xf32> to vector<2x128xf32>
    %104 = arith.addf %102, %103 : vector<2x128xf32>
    %cst_28 = arith.constant 5.000000e-01 : f32
    %105 = vector.broadcast %cst_28 : f32 to vector<2x128xf32>
    %106 = arith.mulf %105, %104 : vector<2x128xf32>
    %107 = math.tanh %106 : vector<2x128xf32>
    %cst_29 = arith.constant 1.000000e+00 : f32
    %108 = vector.broadcast %cst_29 : f32 to vector<2x128xf32>
    %109 = arith.addf %107, %108 : vector<2x128xf32>
    %cst_30 = arith.constant 5.000000e-01 : f32
    %110 = vector.broadcast %cst_30 : f32 to vector<2x128xf32>
    %111 = arith.mulf %110, %109 : vector<2x128xf32>
    %112 = vector.extract_strided_slice %111 {offsets = [0, 32], sizes = [2, 32], strides = [1, 1]} : vector<2x128xf32> to vector<2x32xf32>
    %113 = arith.mulf %112, %76 : vector<2x32xf32>
    %114 = vector.extract_strided_slice %111 {offsets = [0, 0], sizes = [2, 32], strides = [1, 1]} : vector<2x128xf32> to vector<2x32xf32>
    %115 = vector.extract_strided_slice %107 {offsets = [0, 64], sizes = [2, 32], strides = [1, 1]} : vector<2x128xf32> to vector<2x32xf32>
    %116 = arith.mulf %114, %115 : vector<2x32xf32>
    %117 = arith.addf %113, %116 : vector<2x32xf32>
    %118 = vector.extract_strided_slice %111 {offsets = [0, 96], sizes = [2, 32], strides = [1, 1]} : vector<2x128xf32> to vector<2x32xf32>
    %119 = math.tanh %117 : vector<2x32xf32>
    %120 = arith.mulf %118, %119 : vector<2x32xf32>
    %121 = arith.truncf %120 : vector<2x32xf32> to vector<2x32xbf16>
    %122 = vector.extract_strided_slice %12 {offsets = [6, 0], sizes = [2, 128], strides = [1, 1]} : vector<24x128xf32> to vector<2x128xf32>
    %cst_31 = arith.constant dense<0.000000e+00> : vector<2x128xf32>
    %123 = tpu.matmul %100, %14, %cst_31 {dimension_numbers = #tpu.dot_dimension_numbers<[1], [0], [0], [1], [0, 0, 1, 1], [], []>} : vector<2x32xbf16>, vector<32x128xbf16>, vector<2x128xf32> -> vector<2x128xf32>
    %124 = arith.addf %122, %123 : vector<2x128xf32>
    %cst_32 = arith.constant 5.000000e-01 : f32
    %125 = vector.broadcast %cst_32 : f32 to vector<2x128xf32>
    %126 = arith.mulf %125, %124 : vector<2x128xf32>
    %127 = math.tanh %126 : vector<2x128xf32>
    %cst_33 = arith.constant 1.000000e+00 : f32
    %128 = vector.broadcast %cst_33 : f32 to vector<2x128xf32>
    %129 = arith.addf %127, %128 : vector<2x128xf32>
    %cst_34 = arith.constant 5.000000e-01 : f32
    %130 = vector.broadcast %cst_34 : f32 to vector<2x128xf32>
    %131 = arith.mulf %130, %129 : vector<2x128xf32>
    %132 = vector.extract_strided_slice %131 {offsets = [0, 32], sizes = [2, 32], strides = [1, 1]} : vector<2x128xf32> to vector<2x32xf32>
    %133 = arith.mulf %132, %96 : vector<2x32xf32>
    %134 = vector.extract_strided_slice %131 {offsets = [0, 0], sizes = [2, 32], strides = [1, 1]} : vector<2x128xf32> to vector<2x32xf32>
    %135 = vector.extract_strided_slice %127 {offsets = [0, 64], sizes = [2, 32], strides = [1, 1]} : vector<2x128xf32> to vector<2x32xf32>
    %136 = arith.mulf %134, %135 : vector<2x32xf32>
    %137 = arith.addf %133, %136 : vector<2x32xf32>
    %138 = vector.extract_strided_slice %131 {offsets = [0, 96], sizes = [2, 32], strides = [1, 1]} : vector<2x128xf32> to vector<2x32xf32>
    %139 = math.tanh %137 : vector<2x32xf32>
    %140 = arith.mulf %138, %139 : vector<2x32xf32>
    %141 = arith.truncf %140 : vector<2x32xf32> to vector<2x32xbf16>
    %142 = tpu.concatenate %100, %121 in 1 : vector<2x32xbf16>, vector<2x32xbf16> -> vector<2x64xbf16>
    %cst_35 = arith.constant dense<0.000000e+00> : vector<2x128xf32>
    %143 = tpu.matmul %142, %16, %cst_35 {dimension_numbers = #tpu.dot_dimension_numbers<[1], [0], [0], [1], [0, 0, 1, 1], [], []>} : vector<2x64xbf16>, vector<64x128xbf16>, vector<2x128xf32> -> vector<2x128xf32>
    %144 = vector.broadcast %17 : vector<1x128xf32> to vector<2x128xf32>
    %145 = arith.addf %143, %144 : vector<2x128xf32>
    %cst_36 = arith.constant 5.000000e-01 : f32
    %146 = vector.broadcast %cst_36 : f32 to vector<2x128xf32>
    %147 = arith.mulf %146, %145 : vector<2x128xf32>
    %148 = math.tanh %147 : vector<2x128xf32>
    %cst_37 = arith.constant 1.000000e+00 : f32
    %149 = vector.broadcast %cst_37 : f32 to vector<2x128xf32>
    %150 = arith.addf %148, %149 : vector<2x128xf32>
    %cst_38 = arith.constant 5.000000e-01 : f32
    %151 = vector.broadcast %cst_38 : f32 to vector<2x128xf32>
    %152 = arith.mulf %151, %150 : vector<2x128xf32>
    %153 = vector.extract_strided_slice %152 {offsets = [0, 32], sizes = [2, 32], strides = [1, 1]} : vector<2x128xf32> to vector<2x32xf32>
    %154 = arith.mulf %153, %117 : vector<2x32xf32>
    %155 = vector.extract_strided_slice %152 {offsets = [0, 0], sizes = [2, 32], strides = [1, 1]} : vector<2x128xf32> to vector<2x32xf32>
    %156 = vector.extract_strided_slice %148 {offsets = [0, 64], sizes = [2, 32], strides = [1, 1]} : vector<2x128xf32> to vector<2x32xf32>
    %157 = arith.mulf %155, %156 : vector<2x32xf32>
    %158 = arith.addf %154, %157 : vector<2x32xf32>
    %159 = vector.extract_strided_slice %152 {offsets = [0, 96], sizes = [2, 32], strides = [1, 1]} : vector<2x128xf32> to vector<2x32xf32>
    %160 = math.tanh %158 : vector<2x32xf32>
    %161 = arith.mulf %159, %160 : vector<2x32xf32>
    %162 = arith.truncf %161 : vector<2x32xf32> to vector<2x32xbf16>
    %163 = vector.extract_strided_slice %12 {offsets = [8, 0], sizes = [2, 128], strides = [1, 1]} : vector<24x128xf32> to vector<2x128xf32>
    %cst_39 = arith.constant dense<0.000000e+00> : vector<2x128xf32>
    %164 = tpu.matmul %141, %14, %cst_39 {dimension_numbers = #tpu.dot_dimension_numbers<[1], [0], [0], [1], [0, 0, 1, 1], [], []>} : vector<2x32xbf16>, vector<32x128xbf16>, vector<2x128xf32> -> vector<2x128xf32>
    %165 = arith.addf %163, %164 : vector<2x128xf32>
    %cst_40 = arith.constant 5.000000e-01 : f32
    %166 = vector.broadcast %cst_40 : f32 to vector<2x128xf32>
    %167 = arith.mulf %166, %165 : vector<2x128xf32>
    %168 = math.tanh %167 : vector<2x128xf32>
    %cst_41 = arith.constant 1.000000e+00 : f32
    %169 = vector.broadcast %cst_41 : f32 to vector<2x128xf32>
    %170 = arith.addf %168, %169 : vector<2x128xf32>
    %cst_42 = arith.constant 5.000000e-01 : f32
    %171 = vector.broadcast %cst_42 : f32 to vector<2x128xf32>
    %172 = arith.mulf %171, %170 : vector<2x128xf32>
    %173 = vector.extract_strided_slice %172 {offsets = [0, 32], sizes = [2, 32], strides = [1, 1]} : vector<2x128xf32> to vector<2x32xf32>
    %174 = arith.mulf %173, %137 : vector<2x32xf32>
    %175 = vector.extract_strided_slice %172 {offsets = [0, 0], sizes = [2, 32], strides = [1, 1]} : vector<2x128xf32> to vector<2x32xf32>
    %176 = vector.extract_strided_slice %168 {offsets = [0, 64], sizes = [2, 32], strides = [1, 1]} : vector<2x128xf32> to vector<2x32xf32>
    %177 = arith.mulf %175, %176 : vector<2x32xf32>
    %178 = arith.addf %174, %177 : vector<2x32xf32>
    %179 = vector.extract_strided_slice %172 {offsets = [0, 96], sizes = [2, 32], strides = [1, 1]} : vector<2x128xf32> to vector<2x32xf32>
    %180 = math.tanh %178 : vector<2x32xf32>
    %181 = arith.mulf %179, %180 : vector<2x32xf32>
    %182 = arith.truncf %181 : vector<2x32xf32> to vector<2x32xbf16>
    %183 = tpu.concatenate %141, %162 in 1 : vector<2x32xbf16>, vector<2x32xbf16> -> vector<2x64xbf16>
    %cst_43 = arith.constant dense<0.000000e+00> : vector<2x128xf32>
    %184 = tpu.matmul %183, %16, %cst_43 {dimension_numbers = #tpu.dot_dimension_numbers<[1], [0], [0], [1], [0, 0, 1, 1], [], []>} : vector<2x64xbf16>, vector<64x128xbf16>, vector<2x128xf32> -> vector<2x128xf32>
    %185 = vector.broadcast %17 : vector<1x128xf32> to vector<2x128xf32>
    %186 = arith.addf %184, %185 : vector<2x128xf32>
    %cst_44 = arith.constant 5.000000e-01 : f32
    %187 = vector.broadcast %cst_44 : f32 to vector<2x128xf32>
    %188 = arith.mulf %187, %186 : vector<2x128xf32>
    %189 = math.tanh %188 : vector<2x128xf32>
    %cst_45 = arith.constant 1.000000e+00 : f32
    %190 = vector.broadcast %cst_45 : f32 to vector<2x128xf32>
    %191 = arith.addf %189, %190 : vector<2x128xf32>
    %cst_46 = arith.constant 5.000000e-01 : f32
    %192 = vector.broadcast %cst_46 : f32 to vector<2x128xf32>
    %193 = arith.mulf %192, %191 : vector<2x128xf32>
    %194 = vector.extract_strided_slice %193 {offsets = [0, 32], sizes = [2, 32], strides = [1, 1]} : vector<2x128xf32> to vector<2x32xf32>
    %195 = arith.mulf %194, %158 : vector<2x32xf32>
    %196 = vector.extract_strided_slice %193 {offsets = [0, 0], sizes = [2, 32], strides = [1, 1]} : vector<2x128xf32> to vector<2x32xf32>
    %197 = vector.extract_strided_slice %189 {offsets = [0, 64], sizes = [2, 32], strides = [1, 1]} : vector<2x128xf32> to vector<2x32xf32>
    %198 = arith.mulf %196, %197 : vector<2x32xf32>
    %199 = arith.addf %195, %198 : vector<2x32xf32>
    %200 = vector.extract_strided_slice %193 {offsets = [0, 96], sizes = [2, 32], strides = [1, 1]} : vector<2x128xf32> to vector<2x32xf32>
    %201 = math.tanh %199 : vector<2x32xf32>
    %202 = arith.mulf %200, %201 : vector<2x32xf32>
    %203 = arith.truncf %202 : vector<2x32xf32> to vector<2x32xbf16>
    %204 = vector.extract_strided_slice %12 {offsets = [10, 0], sizes = [2, 128], strides = [1, 1]} : vector<24x128xf32> to vector<2x128xf32>
    %cst_47 = arith.constant dense<0.000000e+00> : vector<2x128xf32>
    %205 = tpu.matmul %182, %14, %cst_47 {dimension_numbers = #tpu.dot_dimension_numbers<[1], [0], [0], [1], [0, 0, 1, 1], [], []>} : vector<2x32xbf16>, vector<32x128xbf16>, vector<2x128xf32> -> vector<2x128xf32>
    %206 = arith.addf %204, %205 : vector<2x128xf32>
    %cst_48 = arith.constant 5.000000e-01 : f32
    %207 = vector.broadcast %cst_48 : f32 to vector<2x128xf32>
    %208 = arith.mulf %207, %206 : vector<2x128xf32>
    %209 = math.tanh %208 : vector<2x128xf32>
    %cst_49 = arith.constant 1.000000e+00 : f32
    %210 = vector.broadcast %cst_49 : f32 to vector<2x128xf32>
    %211 = arith.addf %209, %210 : vector<2x128xf32>
    %cst_50 = arith.constant 5.000000e-01 : f32
    %212 = vector.broadcast %cst_50 : f32 to vector<2x128xf32>
    %213 = arith.mulf %212, %211 : vector<2x128xf32>
    %214 = vector.extract_strided_slice %213 {offsets = [0, 32], sizes = [2, 32], strides = [1, 1]} : vector<2x128xf32> to vector<2x32xf32>
    %215 = arith.mulf %214, %178 : vector<2x32xf32>
    %216 = vector.extract_strided_slice %213 {offsets = [0, 0], sizes = [2, 32], strides = [1, 1]} : vector<2x128xf32> to vector<2x32xf32>
    %217 = vector.extract_strided_slice %209 {offsets = [0, 64], sizes = [2, 32], strides = [1, 1]} : vector<2x128xf32> to vector<2x32xf32>
    %218 = arith.mulf %216, %217 : vector<2x32xf32>
    %219 = arith.addf %215, %218 : vector<2x32xf32>
    %220 = vector.extract_strided_slice %213 {offsets = [0, 96], sizes = [2, 32], strides = [1, 1]} : vector<2x128xf32> to vector<2x32xf32>
    %221 = math.tanh %219 : vector<2x32xf32>
    %222 = arith.mulf %220, %221 : vector<2x32xf32>
    %223 = arith.truncf %222 : vector<2x32xf32> to vector<2x32xbf16>
    %224 = tpu.concatenate %182, %203 in 1 : vector<2x32xbf16>, vector<2x32xbf16> -> vector<2x64xbf16>
    %cst_51 = arith.constant dense<0.000000e+00> : vector<2x128xf32>
    %225 = tpu.matmul %224, %16, %cst_51 {dimension_numbers = #tpu.dot_dimension_numbers<[1], [0], [0], [1], [0, 0, 1, 1], [], []>} : vector<2x64xbf16>, vector<64x128xbf16>, vector<2x128xf32> -> vector<2x128xf32>
    %226 = vector.broadcast %17 : vector<1x128xf32> to vector<2x128xf32>
    %227 = arith.addf %225, %226 : vector<2x128xf32>
    %cst_52 = arith.constant 5.000000e-01 : f32
    %228 = vector.broadcast %cst_52 : f32 to vector<2x128xf32>
    %229 = arith.mulf %228, %227 : vector<2x128xf32>
    %230 = math.tanh %229 : vector<2x128xf32>
    %cst_53 = arith.constant 1.000000e+00 : f32
    %231 = vector.broadcast %cst_53 : f32 to vector<2x128xf32>
    %232 = arith.addf %230, %231 : vector<2x128xf32>
    %cst_54 = arith.constant 5.000000e-01 : f32
    %233 = vector.broadcast %cst_54 : f32 to vector<2x128xf32>
    %234 = arith.mulf %233, %232 : vector<2x128xf32>
    %235 = vector.extract_strided_slice %234 {offsets = [0, 32], sizes = [2, 32], strides = [1, 1]} : vector<2x128xf32> to vector<2x32xf32>
    %236 = arith.mulf %235, %199 : vector<2x32xf32>
    %237 = vector.extract_strided_slice %234 {offsets = [0, 0], sizes = [2, 32], strides = [1, 1]} : vector<2x128xf32> to vector<2x32xf32>
    %238 = vector.extract_strided_slice %230 {offsets = [0, 64], sizes = [2, 32], strides = [1, 1]} : vector<2x128xf32> to vector<2x32xf32>
    %239 = arith.mulf %237, %238 : vector<2x32xf32>
    %240 = arith.addf %236, %239 : vector<2x32xf32>
    %241 = vector.extract_strided_slice %234 {offsets = [0, 96], sizes = [2, 32], strides = [1, 1]} : vector<2x128xf32> to vector<2x32xf32>
    %242 = math.tanh %240 : vector<2x32xf32>
    %243 = arith.mulf %241, %242 : vector<2x32xf32>
    %244 = arith.truncf %243 : vector<2x32xf32> to vector<2x32xbf16>
    %245 = vector.extract_strided_slice %12 {offsets = [12, 0], sizes = [2, 128], strides = [1, 1]} : vector<24x128xf32> to vector<2x128xf32>
    %cst_55 = arith.constant dense<0.000000e+00> : vector<2x128xf32>
    %246 = tpu.matmul %223, %14, %cst_55 {dimension_numbers = #tpu.dot_dimension_numbers<[1], [0], [0], [1], [0, 0, 1, 1], [], []>} : vector<2x32xbf16>, vector<32x128xbf16>, vector<2x128xf32> -> vector<2x128xf32>
    %247 = arith.addf %245, %246 : vector<2x128xf32>
    %cst_56 = arith.constant 5.000000e-01 : f32
    %248 = vector.broadcast %cst_56 : f32 to vector<2x128xf32>
    %249 = arith.mulf %248, %247 : vector<2x128xf32>
    %250 = math.tanh %249 : vector<2x128xf32>
    %cst_57 = arith.constant 1.000000e+00 : f32
    %251 = vector.broadcast %cst_57 : f32 to vector<2x128xf32>
    %252 = arith.addf %250, %251 : vector<2x128xf32>
    %cst_58 = arith.constant 5.000000e-01 : f32
    %253 = vector.broadcast %cst_58 : f32 to vector<2x128xf32>
    %254 = arith.mulf %253, %252 : vector<2x128xf32>
    %255 = vector.extract_strided_slice %254 {offsets = [0, 32], sizes = [2, 32], strides = [1, 1]} : vector<2x128xf32> to vector<2x32xf32>
    %256 = arith.mulf %255, %219 : vector<2x32xf32>
    %257 = vector.extract_strided_slice %254 {offsets = [0, 0], sizes = [2, 32], strides = [1, 1]} : vector<2x128xf32> to vector<2x32xf32>
    %258 = vector.extract_strided_slice %250 {offsets = [0, 64], sizes = [2, 32], strides = [1, 1]} : vector<2x128xf32> to vector<2x32xf32>
    %259 = arith.mulf %257, %258 : vector<2x32xf32>
    %260 = arith.addf %256, %259 : vector<2x32xf32>
    %261 = vector.extract_strided_slice %254 {offsets = [0, 96], sizes = [2, 32], strides = [1, 1]} : vector<2x128xf32> to vector<2x32xf32>
    %262 = math.tanh %260 : vector<2x32xf32>
    %263 = arith.mulf %261, %262 : vector<2x32xf32>
    %264 = arith.truncf %263 : vector<2x32xf32> to vector<2x32xbf16>
    %265 = tpu.concatenate %223, %244 in 1 : vector<2x32xbf16>, vector<2x32xbf16> -> vector<2x64xbf16>
    %cst_59 = arith.constant dense<0.000000e+00> : vector<2x128xf32>
    %266 = tpu.matmul %265, %16, %cst_59 {dimension_numbers = #tpu.dot_dimension_numbers<[1], [0], [0], [1], [0, 0, 1, 1], [], []>} : vector<2x64xbf16>, vector<64x128xbf16>, vector<2x128xf32> -> vector<2x128xf32>
    %267 = vector.broadcast %17 : vector<1x128xf32> to vector<2x128xf32>
    %268 = arith.addf %266, %267 : vector<2x128xf32>
    %cst_60 = arith.constant 5.000000e-01 : f32
    %269 = vector.broadcast %cst_60 : f32 to vector<2x128xf32>
    %270 = arith.mulf %269, %268 : vector<2x128xf32>
    %271 = math.tanh %270 : vector<2x128xf32>
    %cst_61 = arith.constant 1.000000e+00 : f32
    %272 = vector.broadcast %cst_61 : f32 to vector<2x128xf32>
    %273 = arith.addf %271, %272 : vector<2x128xf32>
    %cst_62 = arith.constant 5.000000e-01 : f32
    %274 = vector.broadcast %cst_62 : f32 to vector<2x128xf32>
    %275 = arith.mulf %274, %273 : vector<2x128xf32>
    %276 = vector.extract_strided_slice %275 {offsets = [0, 32], sizes = [2, 32], strides = [1, 1]} : vector<2x128xf32> to vector<2x32xf32>
    %277 = arith.mulf %276, %240 : vector<2x32xf32>
    %278 = vector.extract_strided_slice %275 {offsets = [0, 0], sizes = [2, 32], strides = [1, 1]} : vector<2x128xf32> to vector<2x32xf32>
    %279 = vector.extract_strided_slice %271 {offsets = [0, 64], sizes = [2, 32], strides = [1, 1]} : vector<2x128xf32> to vector<2x32xf32>
    %280 = arith.mulf %278, %279 : vector<2x32xf32>
    %281 = arith.addf %277, %280 : vector<2x32xf32>
    %282 = vector.extract_strided_slice %275 {offsets = [0, 96], sizes = [2, 32], strides = [1, 1]} : vector<2x128xf32> to vector<2x32xf32>
    %283 = math.tanh %281 : vector<2x32xf32>
    %284 = arith.mulf %282, %283 : vector<2x32xf32>
    %285 = arith.truncf %284 : vector<2x32xf32> to vector<2x32xbf16>
    %286 = vector.extract_strided_slice %12 {offsets = [14, 0], sizes = [2, 128], strides = [1, 1]} : vector<24x128xf32> to vector<2x128xf32>
    %cst_63 = arith.constant dense<0.000000e+00> : vector<2x128xf32>
    %287 = tpu.matmul %264, %14, %cst_63 {dimension_numbers = #tpu.dot_dimension_numbers<[1], [0], [0], [1], [0, 0, 1, 1], [], []>} : vector<2x32xbf16>, vector<32x128xbf16>, vector<2x128xf32> -> vector<2x128xf32>
    %288 = arith.addf %286, %287 : vector<2x128xf32>
    %cst_64 = arith.constant 5.000000e-01 : f32
    %289 = vector.broadcast %cst_64 : f32 to vector<2x128xf32>
    %290 = arith.mulf %289, %288 : vector<2x128xf32>
    %291 = math.tanh %290 : vector<2x128xf32>
    %cst_65 = arith.constant 1.000000e+00 : f32
    %292 = vector.broadcast %cst_65 : f32 to vector<2x128xf32>
    %293 = arith.addf %291, %292 : vector<2x128xf32>
    %cst_66 = arith.constant 5.000000e-01 : f32
    %294 = vector.broadcast %cst_66 : f32 to vector<2x128xf32>
    %295 = arith.mulf %294, %293 : vector<2x128xf32>
    %296 = vector.extract_strided_slice %295 {offsets = [0, 32], sizes = [2, 32], strides = [1, 1]} : vector<2x128xf32> to vector<2x32xf32>
    %297 = arith.mulf %296, %260 : vector<2x32xf32>
    %298 = vector.extract_strided_slice %295 {offsets = [0, 0], sizes = [2, 32], strides = [1, 1]} : vector<2x128xf32> to vector<2x32xf32>
    %299 = vector.extract_strided_slice %291 {offsets = [0, 64], sizes = [2, 32], strides = [1, 1]} : vector<2x128xf32> to vector<2x32xf32>
    %300 = arith.mulf %298, %299 : vector<2x32xf32>
    %301 = arith.addf %297, %300 : vector<2x32xf32>
    %302 = vector.extract_strided_slice %295 {offsets = [0, 96], sizes = [2, 32], strides = [1, 1]} : vector<2x128xf32> to vector<2x32xf32>
    %303 = math.tanh %301 : vector<2x32xf32>
    %304 = arith.mulf %302, %303 : vector<2x32xf32>
    %305 = arith.truncf %304 : vector<2x32xf32> to vector<2x32xbf16>
    %306 = tpu.concatenate %264, %285 in 1 : vector<2x32xbf16>, vector<2x32xbf16> -> vector<2x64xbf16>
    %cst_67 = arith.constant dense<0.000000e+00> : vector<2x128xf32>
    %307 = tpu.matmul %306, %16, %cst_67 {dimension_numbers = #tpu.dot_dimension_numbers<[1], [0], [0], [1], [0, 0, 1, 1], [], []>} : vector<2x64xbf16>, vector<64x128xbf16>, vector<2x128xf32> -> vector<2x128xf32>
    %308 = vector.broadcast %17 : vector<1x128xf32> to vector<2x128xf32>
    %309 = arith.addf %307, %308 : vector<2x128xf32>
    %cst_68 = arith.constant 5.000000e-01 : f32
    %310 = vector.broadcast %cst_68 : f32 to vector<2x128xf32>
    %311 = arith.mulf %310, %309 : vector<2x128xf32>
    %312 = math.tanh %311 : vector<2x128xf32>
    %cst_69 = arith.constant 1.000000e+00 : f32
    %313 = vector.broadcast %cst_69 : f32 to vector<2x128xf32>
    %314 = arith.addf %312, %313 : vector<2x128xf32>
    %cst_70 = arith.constant 5.000000e-01 : f32
    %315 = vector.broadcast %cst_70 : f32 to vector<2x128xf32>
    %316 = arith.mulf %315, %314 : vector<2x128xf32>
    %317 = vector.extract_strided_slice %316 {offsets = [0, 32], sizes = [2, 32], strides = [1, 1]} : vector<2x128xf32> to vector<2x32xf32>
    %318 = arith.mulf %317, %281 : vector<2x32xf32>
    %319 = vector.extract_strided_slice %316 {offsets = [0, 0], sizes = [2, 32], strides = [1, 1]} : vector<2x128xf32> to vector<2x32xf32>
    %320 = vector.extract_strided_slice %312 {offsets = [0, 64], sizes = [2, 32], strides = [1, 1]} : vector<2x128xf32> to vector<2x32xf32>
    %321 = arith.mulf %319, %320 : vector<2x32xf32>
    %322 = arith.addf %318, %321 : vector<2x32xf32>
    %323 = vector.extract_strided_slice %316 {offsets = [0, 96], sizes = [2, 32], strides = [1, 1]} : vector<2x128xf32> to vector<2x32xf32>
    %324 = math.tanh %322 : vector<2x32xf32>
    %325 = arith.mulf %323, %324 : vector<2x32xf32>
    %326 = arith.truncf %325 : vector<2x32xf32> to vector<2x32xbf16>
    %327 = vector.extract_strided_slice %12 {offsets = [16, 0], sizes = [2, 128], strides = [1, 1]} : vector<24x128xf32> to vector<2x128xf32>
    %cst_71 = arith.constant dense<0.000000e+00> : vector<2x128xf32>
    %328 = tpu.matmul %305, %14, %cst_71 {dimension_numbers = #tpu.dot_dimension_numbers<[1], [0], [0], [1], [0, 0, 1, 1], [], []>} : vector<2x32xbf16>, vector<32x128xbf16>, vector<2x128xf32> -> vector<2x128xf32>
    %329 = arith.addf %327, %328 : vector<2x128xf32>
    %cst_72 = arith.constant 5.000000e-01 : f32
    %330 = vector.broadcast %cst_72 : f32 to vector<2x128xf32>
    %331 = arith.mulf %330, %329 : vector<2x128xf32>
    %332 = math.tanh %331 : vector<2x128xf32>
    %cst_73 = arith.constant 1.000000e+00 : f32
    %333 = vector.broadcast %cst_73 : f32 to vector<2x128xf32>
    %334 = arith.addf %332, %333 : vector<2x128xf32>
    %cst_74 = arith.constant 5.000000e-01 : f32
    %335 = vector.broadcast %cst_74 : f32 to vector<2x128xf32>
    %336 = arith.mulf %335, %334 : vector<2x128xf32>
    %337 = vector.extract_strided_slice %336 {offsets = [0, 32], sizes = [2, 32], strides = [1, 1]} : vector<2x128xf32> to vector<2x32xf32>
    %338 = arith.mulf %337, %301 : vector<2x32xf32>
    %339 = vector.extract_strided_slice %336 {offsets = [0, 0], sizes = [2, 32], strides = [1, 1]} : vector<2x128xf32> to vector<2x32xf32>
    %340 = vector.extract_strided_slice %332 {offsets = [0, 64], sizes = [2, 32], strides = [1, 1]} : vector<2x128xf32> to vector<2x32xf32>
    %341 = arith.mulf %339, %340 : vector<2x32xf32>
    %342 = arith.addf %338, %341 : vector<2x32xf32>
    %343 = vector.extract_strided_slice %336 {offsets = [0, 96], sizes = [2, 32], strides = [1, 1]} : vector<2x128xf32> to vector<2x32xf32>
    %344 = math.tanh %342 : vector<2x32xf32>
    %345 = arith.mulf %343, %344 : vector<2x32xf32>
    %346 = arith.truncf %345 : vector<2x32xf32> to vector<2x32xbf16>
    %347 = tpu.concatenate %305, %326 in 1 : vector<2x32xbf16>, vector<2x32xbf16> -> vector<2x64xbf16>
    %cst_75 = arith.constant dense<0.000000e+00> : vector<2x128xf32>
    %348 = tpu.matmul %347, %16, %cst_75 {dimension_numbers = #tpu.dot_dimension_numbers<[1], [0], [0], [1], [0, 0, 1, 1], [], []>} : vector<2x64xbf16>, vector<64x128xbf16>, vector<2x128xf32> -> vector<2x128xf32>
    %349 = vector.broadcast %17 : vector<1x128xf32> to vector<2x128xf32>
    %350 = arith.addf %348, %349 : vector<2x128xf32>
    %cst_76 = arith.constant 5.000000e-01 : f32
    %351 = vector.broadcast %cst_76 : f32 to vector<2x128xf32>
    %352 = arith.mulf %351, %350 : vector<2x128xf32>
    %353 = math.tanh %352 : vector<2x128xf32>
    %cst_77 = arith.constant 1.000000e+00 : f32
    %354 = vector.broadcast %cst_77 : f32 to vector<2x128xf32>
    %355 = arith.addf %353, %354 : vector<2x128xf32>
    %cst_78 = arith.constant 5.000000e-01 : f32
    %356 = vector.broadcast %cst_78 : f32 to vector<2x128xf32>
    %357 = arith.mulf %356, %355 : vector<2x128xf32>
    %358 = vector.extract_strided_slice %357 {offsets = [0, 32], sizes = [2, 32], strides = [1, 1]} : vector<2x128xf32> to vector<2x32xf32>
    %359 = arith.mulf %358, %322 : vector<2x32xf32>
    %360 = vector.extract_strided_slice %357 {offsets = [0, 0], sizes = [2, 32], strides = [1, 1]} : vector<2x128xf32> to vector<2x32xf32>
    %361 = vector.extract_strided_slice %353 {offsets = [0, 64], sizes = [2, 32], strides = [1, 1]} : vector<2x128xf32> to vector<2x32xf32>
    %362 = arith.mulf %360, %361 : vector<2x32xf32>
    %363 = arith.addf %359, %362 : vector<2x32xf32>
    %364 = vector.extract_strided_slice %357 {offsets = [0, 96], sizes = [2, 32], strides = [1, 1]} : vector<2x128xf32> to vector<2x32xf32>
    %365 = math.tanh %363 : vector<2x32xf32>
    %366 = arith.mulf %364, %365 : vector<2x32xf32>
    %367 = arith.truncf %366 : vector<2x32xf32> to vector<2x32xbf16>
    %368 = vector.extract_strided_slice %12 {offsets = [18, 0], sizes = [2, 128], strides = [1, 1]} : vector<24x128xf32> to vector<2x128xf32>
    %cst_79 = arith.constant dense<0.000000e+00> : vector<2x128xf32>
    %369 = tpu.matmul %346, %14, %cst_79 {dimension_numbers = #tpu.dot_dimension_numbers<[1], [0], [0], [1], [0, 0, 1, 1], [], []>} : vector<2x32xbf16>, vector<32x128xbf16>, vector<2x128xf32> -> vector<2x128xf32>
    %370 = arith.addf %368, %369 : vector<2x128xf32>
    %cst_80 = arith.constant 5.000000e-01 : f32
    %371 = vector.broadcast %cst_80 : f32 to vector<2x128xf32>
    %372 = arith.mulf %371, %370 : vector<2x128xf32>
    %373 = math.tanh %372 : vector<2x128xf32>
    %cst_81 = arith.constant 1.000000e+00 : f32
    %374 = vector.broadcast %cst_81 : f32 to vector<2x128xf32>
    %375 = arith.addf %373, %374 : vector<2x128xf32>
    %cst_82 = arith.constant 5.000000e-01 : f32
    %376 = vector.broadcast %cst_82 : f32 to vector<2x128xf32>
    %377 = arith.mulf %376, %375 : vector<2x128xf32>
    %378 = vector.extract_strided_slice %377 {offsets = [0, 32], sizes = [2, 32], strides = [1, 1]} : vector<2x128xf32> to vector<2x32xf32>
    %379 = arith.mulf %378, %342 : vector<2x32xf32>
    %380 = vector.extract_strided_slice %377 {offsets = [0, 0], sizes = [2, 32], strides = [1, 1]} : vector<2x128xf32> to vector<2x32xf32>
    %381 = vector.extract_strided_slice %373 {offsets = [0, 64], sizes = [2, 32], strides = [1, 1]} : vector<2x128xf32> to vector<2x32xf32>
    %382 = arith.mulf %380, %381 : vector<2x32xf32>
    %383 = arith.addf %379, %382 : vector<2x32xf32>
    %384 = vector.extract_strided_slice %377 {offsets = [0, 96], sizes = [2, 32], strides = [1, 1]} : vector<2x128xf32> to vector<2x32xf32>
    %385 = math.tanh %383 : vector<2x32xf32>
    %386 = arith.mulf %384, %385 : vector<2x32xf32>
    %387 = arith.truncf %386 : vector<2x32xf32> to vector<2x32xbf16>
    %388 = tpu.concatenate %346, %367 in 1 : vector<2x32xbf16>, vector<2x32xbf16> -> vector<2x64xbf16>
    %cst_83 = arith.constant dense<0.000000e+00> : vector<2x128xf32>
    %389 = tpu.matmul %388, %16, %cst_83 {dimension_numbers = #tpu.dot_dimension_numbers<[1], [0], [0], [1], [0, 0, 1, 1], [], []>} : vector<2x64xbf16>, vector<64x128xbf16>, vector<2x128xf32> -> vector<2x128xf32>
    %390 = vector.broadcast %17 : vector<1x128xf32> to vector<2x128xf32>
    %391 = arith.addf %389, %390 : vector<2x128xf32>
    %cst_84 = arith.constant 5.000000e-01 : f32
    %392 = vector.broadcast %cst_84 : f32 to vector<2x128xf32>
    %393 = arith.mulf %392, %391 : vector<2x128xf32>
    %394 = math.tanh %393 : vector<2x128xf32>
    %cst_85 = arith.constant 1.000000e+00 : f32
    %395 = vector.broadcast %cst_85 : f32 to vector<2x128xf32>
    %396 = arith.addf %394, %395 : vector<2x128xf32>
    %cst_86 = arith.constant 5.000000e-01 : f32
    %397 = vector.broadcast %cst_86 : f32 to vector<2x128xf32>
    %398 = arith.mulf %397, %396 : vector<2x128xf32>
    %399 = vector.extract_strided_slice %398 {offsets = [0, 32], sizes = [2, 32], strides = [1, 1]} : vector<2x128xf32> to vector<2x32xf32>
    %400 = arith.mulf %399, %363 : vector<2x32xf32>
    %401 = vector.extract_strided_slice %398 {offsets = [0, 0], sizes = [2, 32], strides = [1, 1]} : vector<2x128xf32> to vector<2x32xf32>
    %402 = vector.extract_strided_slice %394 {offsets = [0, 64], sizes = [2, 32], strides = [1, 1]} : vector<2x128xf32> to vector<2x32xf32>
    %403 = arith.mulf %401, %402 : vector<2x32xf32>
    %404 = arith.addf %400, %403 : vector<2x32xf32>
    %405 = vector.extract_strided_slice %398 {offsets = [0, 96], sizes = [2, 32], strides = [1, 1]} : vector<2x128xf32> to vector<2x32xf32>
    %406 = math.tanh %404 : vector<2x32xf32>
    %407 = arith.mulf %405, %406 : vector<2x32xf32>
    %408 = arith.truncf %407 : vector<2x32xf32> to vector<2x32xbf16>
    %409 = vector.extract_strided_slice %12 {offsets = [20, 0], sizes = [2, 128], strides = [1, 1]} : vector<24x128xf32> to vector<2x128xf32>
    %cst_87 = arith.constant dense<0.000000e+00> : vector<2x128xf32>
    %410 = tpu.matmul %387, %14, %cst_87 {dimension_numbers = #tpu.dot_dimension_numbers<[1], [0], [0], [1], [0, 0, 1, 1], [], []>} : vector<2x32xbf16>, vector<32x128xbf16>, vector<2x128xf32> -> vector<2x128xf32>
    %411 = arith.addf %409, %410 : vector<2x128xf32>
    %cst_88 = arith.constant 5.000000e-01 : f32
    %412 = vector.broadcast %cst_88 : f32 to vector<2x128xf32>
    %413 = arith.mulf %412, %411 : vector<2x128xf32>
    %414 = math.tanh %413 : vector<2x128xf32>
    %cst_89 = arith.constant 1.000000e+00 : f32
    %415 = vector.broadcast %cst_89 : f32 to vector<2x128xf32>
    %416 = arith.addf %414, %415 : vector<2x128xf32>
    %cst_90 = arith.constant 5.000000e-01 : f32
    %417 = vector.broadcast %cst_90 : f32 to vector<2x128xf32>
    %418 = arith.mulf %417, %416 : vector<2x128xf32>
    %419 = vector.extract_strided_slice %418 {offsets = [0, 32], sizes = [2, 32], strides = [1, 1]} : vector<2x128xf32> to vector<2x32xf32>
    %420 = arith.mulf %419, %383 : vector<2x32xf32>
    %421 = vector.extract_strided_slice %418 {offsets = [0, 0], sizes = [2, 32], strides = [1, 1]} : vector<2x128xf32> to vector<2x32xf32>
    %422 = vector.extract_strided_slice %414 {offsets = [0, 64], sizes = [2, 32], strides = [1, 1]} : vector<2x128xf32> to vector<2x32xf32>
    %423 = arith.mulf %421, %422 : vector<2x32xf32>
    %424 = arith.addf %420, %423 : vector<2x32xf32>
    %425 = vector.extract_strided_slice %418 {offsets = [0, 96], sizes = [2, 32], strides = [1, 1]} : vector<2x128xf32> to vector<2x32xf32>
    %426 = math.tanh %424 : vector<2x32xf32>
    %427 = arith.mulf %425, %426 : vector<2x32xf32>
    %428 = arith.truncf %427 : vector<2x32xf32> to vector<2x32xbf16>
    %429 = tpu.concatenate %387, %408 in 1 : vector<2x32xbf16>, vector<2x32xbf16> -> vector<2x64xbf16>
    %cst_91 = arith.constant dense<0.000000e+00> : vector<2x128xf32>
    %430 = tpu.matmul %429, %16, %cst_91 {dimension_numbers = #tpu.dot_dimension_numbers<[1], [0], [0], [1], [0, 0, 1, 1], [], []>} : vector<2x64xbf16>, vector<64x128xbf16>, vector<2x128xf32> -> vector<2x128xf32>
    %431 = vector.broadcast %17 : vector<1x128xf32> to vector<2x128xf32>
    %432 = arith.addf %430, %431 : vector<2x128xf32>
    %cst_92 = arith.constant 5.000000e-01 : f32
    %433 = vector.broadcast %cst_92 : f32 to vector<2x128xf32>
    %434 = arith.mulf %433, %432 : vector<2x128xf32>
    %435 = math.tanh %434 : vector<2x128xf32>
    %cst_93 = arith.constant 1.000000e+00 : f32
    %436 = vector.broadcast %cst_93 : f32 to vector<2x128xf32>
    %437 = arith.addf %435, %436 : vector<2x128xf32>
    %cst_94 = arith.constant 5.000000e-01 : f32
    %438 = vector.broadcast %cst_94 : f32 to vector<2x128xf32>
    %439 = arith.mulf %438, %437 : vector<2x128xf32>
    %440 = vector.extract_strided_slice %439 {offsets = [0, 32], sizes = [2, 32], strides = [1, 1]} : vector<2x128xf32> to vector<2x32xf32>
    %441 = arith.mulf %440, %404 : vector<2x32xf32>
    %442 = vector.extract_strided_slice %439 {offsets = [0, 0], sizes = [2, 32], strides = [1, 1]} : vector<2x128xf32> to vector<2x32xf32>
    %443 = vector.extract_strided_slice %435 {offsets = [0, 64], sizes = [2, 32], strides = [1, 1]} : vector<2x128xf32> to vector<2x32xf32>
    %444 = arith.mulf %442, %443 : vector<2x32xf32>
    %445 = arith.addf %441, %444 : vector<2x32xf32>
    %446 = vector.extract_strided_slice %439 {offsets = [0, 96], sizes = [2, 32], strides = [1, 1]} : vector<2x128xf32> to vector<2x32xf32>
    %447 = math.tanh %445 : vector<2x32xf32>
    %448 = arith.mulf %446, %447 : vector<2x32xf32>
    %449 = arith.truncf %448 : vector<2x32xf32> to vector<2x32xbf16>
    %450 = vector.extract_strided_slice %12 {offsets = [22, 0], sizes = [2, 128], strides = [1, 1]} : vector<24x128xf32> to vector<2x128xf32>
    %cst_95 = arith.constant dense<0.000000e+00> : vector<2x128xf32>
    %451 = tpu.matmul %428, %14, %cst_95 {dimension_numbers = #tpu.dot_dimension_numbers<[1], [0], [0], [1], [0, 0, 1, 1], [], []>} : vector<2x32xbf16>, vector<32x128xbf16>, vector<2x128xf32> -> vector<2x128xf32>
    %452 = arith.addf %450, %451 : vector<2x128xf32>
    %cst_96 = arith.constant 5.000000e-01 : f32
    %453 = vector.broadcast %cst_96 : f32 to vector<2x128xf32>
    %454 = arith.mulf %453, %452 : vector<2x128xf32>
    %455 = math.tanh %454 : vector<2x128xf32>
    %cst_97 = arith.constant 1.000000e+00 : f32
    %456 = vector.broadcast %cst_97 : f32 to vector<2x128xf32>
    %457 = arith.addf %455, %456 : vector<2x128xf32>
    %cst_98 = arith.constant 5.000000e-01 : f32
    %458 = vector.broadcast %cst_98 : f32 to vector<2x128xf32>
    %459 = arith.mulf %458, %457 : vector<2x128xf32>
    %460 = vector.extract_strided_slice %459 {offsets = [0, 32], sizes = [2, 32], strides = [1, 1]} : vector<2x128xf32> to vector<2x32xf32>
    %461 = arith.mulf %460, %424 : vector<2x32xf32>
    %462 = vector.extract_strided_slice %459 {offsets = [0, 0], sizes = [2, 32], strides = [1, 1]} : vector<2x128xf32> to vector<2x32xf32>
    %463 = vector.extract_strided_slice %455 {offsets = [0, 64], sizes = [2, 32], strides = [1, 1]} : vector<2x128xf32> to vector<2x32xf32>
    %464 = arith.mulf %462, %463 : vector<2x32xf32>
    %465 = arith.addf %461, %464 : vector<2x32xf32>
    %466 = vector.extract_strided_slice %459 {offsets = [0, 96], sizes = [2, 32], strides = [1, 1]} : vector<2x128xf32> to vector<2x32xf32>
    %467 = math.tanh %465 : vector<2x32xf32>
    %468 = arith.mulf %466, %467 : vector<2x32xf32>
    %469 = arith.truncf %468 : vector<2x32xf32> to vector<2x32xbf16>
    %470 = tpu.concatenate %428, %449 in 1 : vector<2x32xbf16>, vector<2x32xbf16> -> vector<2x64xbf16>
    %cst_99 = arith.constant dense<0.000000e+00> : vector<2x128xf32>
    %471 = tpu.matmul %470, %16, %cst_99 {dimension_numbers = #tpu.dot_dimension_numbers<[1], [0], [0], [1], [0, 0, 1, 1], [], []>} : vector<2x64xbf16>, vector<64x128xbf16>, vector<2x128xf32> -> vector<2x128xf32>
    %472 = vector.broadcast %17 : vector<1x128xf32> to vector<2x128xf32>
    %473 = arith.addf %471, %472 : vector<2x128xf32>
    %cst_100 = arith.constant 5.000000e-01 : f32
    %474 = vector.broadcast %cst_100 : f32 to vector<2x128xf32>
    %475 = arith.mulf %474, %473 : vector<2x128xf32>
    %476 = math.tanh %475 : vector<2x128xf32>
    %cst_101 = arith.constant 1.000000e+00 : f32
    %477 = vector.broadcast %cst_101 : f32 to vector<2x128xf32>
    %478 = arith.addf %476, %477 : vector<2x128xf32>
    %cst_102 = arith.constant 5.000000e-01 : f32
    %479 = vector.broadcast %cst_102 : f32 to vector<2x128xf32>
    %480 = arith.mulf %479, %478 : vector<2x128xf32>
    %481 = vector.extract_strided_slice %480 {offsets = [0, 32], sizes = [2, 32], strides = [1, 1]} : vector<2x128xf32> to vector<2x32xf32>
    %482 = arith.mulf %481, %445 : vector<2x32xf32>
    %483 = vector.extract_strided_slice %480 {offsets = [0, 0], sizes = [2, 32], strides = [1, 1]} : vector<2x128xf32> to vector<2x32xf32>
    %484 = vector.extract_strided_slice %476 {offsets = [0, 64], sizes = [2, 32], strides = [1, 1]} : vector<2x128xf32> to vector<2x32xf32>
    %485 = arith.mulf %483, %484 : vector<2x32xf32>
    %486 = arith.addf %482, %485 : vector<2x32xf32>
    %487 = vector.extract_strided_slice %480 {offsets = [0, 96], sizes = [2, 32], strides = [1, 1]} : vector<2x128xf32> to vector<2x32xf32>
    %488 = math.tanh %486 : vector<2x32xf32>
    %489 = arith.mulf %487, %488 : vector<2x32xf32>
    %490 = arith.truncf %489 : vector<2x32xf32> to vector<2x32xbf16>
    %491 = tpu.concatenate %469, %490 in 1 : vector<2x32xbf16>, vector<2x32xbf16> -> vector<2x64xbf16>
    %cst_103 = arith.constant dense<0.000000e+00> : vector<2x128xf32>
    %492 = tpu.matmul %491, %16, %cst_103 {dimension_numbers = #tpu.dot_dimension_numbers<[1], [0], [0], [1], [0, 0, 1, 1], [], []>} : vector<2x64xbf16>, vector<64x128xbf16>, vector<2x128xf32> -> vector<2x128xf32>
    %493 = vector.broadcast %17 : vector<1x128xf32> to vector<2x128xf32>
    %494 = arith.addf %492, %493 : vector<2x128xf32>
    %cst_104 = arith.constant 5.000000e-01 : f32
    %495 = vector.broadcast %cst_104 : f32 to vector<2x128xf32>
    %496 = arith.mulf %495, %494 : vector<2x128xf32>
    %497 = math.tanh %496 : vector<2x128xf32>
    %cst_105 = arith.constant 1.000000e+00 : f32
    %498 = vector.broadcast %cst_105 : f32 to vector<2x128xf32>
    %499 = arith.addf %497, %498 : vector<2x128xf32>
    %cst_106 = arith.constant 5.000000e-01 : f32
    %500 = vector.broadcast %cst_106 : f32 to vector<2x128xf32>
    %501 = arith.mulf %500, %499 : vector<2x128xf32>
    %502 = vector.extract_strided_slice %501 {offsets = [0, 32], sizes = [2, 32], strides = [1, 1]} : vector<2x128xf32> to vector<2x32xf32>
    %503 = arith.mulf %502, %486 : vector<2x32xf32>
    %504 = vector.extract_strided_slice %501 {offsets = [0, 0], sizes = [2, 32], strides = [1, 1]} : vector<2x128xf32> to vector<2x32xf32>
    %505 = vector.extract_strided_slice %497 {offsets = [0, 64], sizes = [2, 32], strides = [1, 1]} : vector<2x128xf32> to vector<2x32xf32>
    %506 = arith.mulf %504, %505 : vector<2x32xf32>
    %507 = arith.addf %503, %506 : vector<2x32xf32>
    %508 = vector.extract_strided_slice %501 {offsets = [0, 96], sizes = [2, 32], strides = [1, 1]} : vector<2x128xf32> to vector<2x32xf32>
    %509 = math.tanh %507 : vector<2x32xf32>
    %510 = arith.mulf %508, %509 : vector<2x32xf32>
    %511 = tpu.concatenate %243, %284, %325, %366, %407, %448, %489, %510 in 0 : vector<2x32xf32>, vector<2x32xf32>, vector<2x32xf32>, vector<2x32xf32>, vector<2x32xf32>, vector<2x32xf32>, vector<2x32xf32>, vector<2x32xf32> -> vector<16x32xf32>
    %c144 = arith.constant 144 : index
    %c0_107 = arith.constant 0 : index
    %512 = vector.load %arg2[%c144, %c0_107] : memref<184x128xf32, #tpu.memory_space<vmem>>, vector<32x128xf32>
    %cst_108 = arith.constant dense<0.000000e+00> : vector<16x128xf32>
    %513 = tpu.matmul %511, %512, %cst_108 {dimension_numbers = #tpu.dot_dimension_numbers<[1], [0], [0], [1], [0, 0, 1, 1], [], []>} : vector<16x32xf32>, vector<32x128xf32>, vector<16x128xf32> -> vector<16x128xf32>
    %c176 = arith.constant 176 : index
    %c0_109 = arith.constant 0 : index
    %514 = vector.load %arg2[%c176, %c0_109] : memref<184x128xf32, #tpu.memory_space<vmem>>, vector<1x128xf32>
    %515 = vector.broadcast %514 : vector<1x128xf32> to vector<16x128xf32>
    %516 = arith.addf %513, %515 : vector<16x128xf32>
    %c0_110 = arith.constant 0 : index
    %c0_111 = arith.constant 0 : index
    %517 = vector.load %arg3[%c0_110, %c0_111] : memref<16x128xf32, #tpu.memory_space<vmem>>, vector<16x128xf32>
    tpu.vector_store %arg3[%c0_110, %c0_111], %516 {strides = array<i32>} : memref<16x128xf32, #tpu.memory_space<vmem>>, vector<16x128xf32>,
    return
  }
}

</mosaic_0001>

<llo_original>
// kernel: lstm_model_forward.1
$region0: #{lstm_model_forward.1}
  #allocation0 [shape = 'u32[]', space=smem, size = 0x4, offset = 0x4, fixed_abs, tag = 'smem constant byte address 0x4 - core index']
  #allocation1 [shape = 'u32[144,128]{1,0:T(1,128)}', space=vmem, size = 0x12000, scoped, tag = 'internal scratch']
  %s0 = inlined_call_operand.vmem [shape: s32[24,1], index: 0, kind: input, shape index: {}]
  %s1 = inlined_call_operand.vmem [shape: f32[128,32], index: 1, kind: input, shape index: {}]
  %s2 = inlined_call_operand.vmem [shape: f32[184,128], index: 2, kind: input, shape index: {}]
  %s3 = inlined_call_operand.vmem [shape: f32[16,128], index: 3, kind: output, shape index: {}]
  %s4 = sld [smem:[#allocation0]]
  $region22: #{lstm_model_forward.1} parent=0
    _
  %s6 = ssub.s32 1, %s4
  %s7 = scalar_select 0, %s6, %s4
  // Predicated region
  $region2: #{lstm_model_forward.1} parent=0 // pred_check
    _
  $region3: #{lstm_model_forward.1} parent=0 // pred_check_branch
    %9 = sbr.rel (0) target = $region5
  $region4: #{lstm_model_forward.1} parent=0 // pred_region
    _
  $region5: #{lstm_model_forward.1} parent=0 // pred_fallthru
    _
  // Predicated region
  $region6: #{lstm_model_forward.1} parent=0 // pred_check
    _
  $region7: #{lstm_model_forward.1} parent=0 // pred_check_branch
    %11 = sbr.rel (0) target = $region9
  $region8: #{lstm_model_forward.1} parent=0 // pred_region
    _
  $region9: #{lstm_model_forward.1} parent=0 // pred_fallthru
    _
  // Predicated region
  $region10: #{lstm_model_forward.1} parent=0 // pred_check
    _
  $region11: #{lstm_model_forward.1} parent=0 // pred_check_branch
    %13 = sbr.rel (0) target = $region13
  $region12: #{lstm_model_forward.1} parent=0 // pred_region
    _
  $region13: #{lstm_model_forward.1} parent=0 // pred_fallthru
    _
  %v15 = vlaneseq
  %v16 = vand.u32 %v15, 127
  %v17 = vld [vmem:[%s0] sm:$0xff]
  %v18 = vld [vmem:[%s0 + $0x8] sm:$0xff]
  %v19 = vld [vmem:[%s0 + $0x10] sm:$0xff]
  %20 = vset.pattern.permute.xlu0 0
  %21 = vperm.xlu0 %20, %v17
  %v22 = vpop.permute.xlu0 %21
  %23 = vset.pattern.permute.xlu0 0
  %24 = vperm.xlu0 %23, %v18
  %v25 = vpop.permute.xlu0 %24
  %26 = vset.pattern.permute.xlu0 0
  %27 = vperm.xlu0 %26, %v19
  %v28 = vpop.permute.xlu0 %27
  %vm29 = vcmp.eq.s32.totalorder %v16, %v22
  %vm30 = vcmp.eq.s32.totalorder %v16, %v25
  %vm31 = vcmp.eq.s32.totalorder %v16, %v28
  %v32 = vsel %vm29, 1, 0
  %v33 = vsel %vm30, 1, 0
  %v34 = vsel %vm31, 1, 0
  %v35 = vcvt.s32.f32 %v32
  %v36 = vcvt.s32.f32 %v33
  %v37 = vcvt.s32.f32 %v34
  %v38 = vld [vmem:[%s1] sm:$0xff]
  %v39 = vld [vmem:[%s1 + $0x8] sm:$0xff]
  %v40 = vld [vmem:[%s1 + $0x10] sm:$0xff]
  %v41 = vld [vmem:[%s1 + $0x18] sm:$0xff]
  %v42 = vld [vmem:[%s1 + $0x20] sm:$0xff]
  %v43 = vld [vmem:[%s1 + $0x28] sm:$0xff]
  %v44 = vld [vmem:[%s1 + $0x30] sm:$0xff]
  %v45 = vld [vmem:[%s1 + $0x38] sm:$0xff]
  %v46 = vld [vmem:[%s1 + $0x40] sm:$0xff]
  %v47 = vld [vmem:[%s1 + $0x48] sm:$0xff]
  %v48 = vld [vmem:[%s1 + $0x50] sm:$0xff]
  %v49 = vld [vmem:[%s1 + $0x58] sm:$0xff]
  %v50 = vld [vmem:[%s1 + $0x60] sm:$0xff]
  %v51 = vld [vmem:[%s1 + $0x68] sm:$0xff]
  %v52 = vld [vmem:[%s1 + $0x70] sm:$0xff]
  %v53 = vld [vmem:[%s1 + $0x78] sm:$0xff]
  %54 = vmatprep.subr.mxu0 0.0
  %55 = vmatpush1.msra.mxu0 %v38
  %56 = vmatprep.subr.mxu0 0.0
  %57 = vmatpush1.msra.mxu0 %v39
  %58 = vmatprep.subr.mxu0 0.0
  %59 = vmatpush1.msra.mxu0 %v40
  %60 = vmatprep.subr.mxu0 0.0
  %61 = vmatpush1.msra.mxu0 %v41
  %62 = vmatprep.subr.mxu0 0.0
  %63 = vmatpush1.msra.mxu0 %v42
  %64 = vmatprep.subr.mxu0 0.0
  %65 = vmatpush1.msra.mxu0 %v43
  %66 = vmatprep.subr.mxu0 0.0
  %67 = vmatpush1.msra.mxu0 %v44
  %68 = vmatprep.subr.mxu0 0.0
  %69 = vmatpush1.msra.mxu0 %v45
  %70 = vmatprep.subr.mxu0 0.0
  %71 = vmatpush1.msra.mxu0 %v46
  %72 = vmatprep.subr.mxu0 0.0
  %73 = vmatpush1.msra.mxu0 %v47
  %74 = vmatprep.subr.mxu0 0.0
  %75 = vmatpush1.msra.mxu0 %v48
  %76 = vmatprep.subr.mxu0 0.0
  %77 = vmatpush1.msra.mxu0 %v49
  %78 = vmatprep.subr.mxu0 0.0
  %79 = vmatpush1.msra.mxu0 %v50
  %80 = vmatprep.subr.mxu0 0.0
  %81 = vmatpush1.msra.mxu0 %v51
  %82 = vmatprep.subr.mxu0 0.0
  %83 = vmatpush1.msra.mxu0 %v52
  %84 = vmatprep.subr.mxu0 0.0
  %85 = vmatpush1.msra.mxu0 %v53
  %86 = vmatprep.subr.mxu0 0.0
  %87 = vmatpush1.msra.mxu0 0.0
  %88 = vmatprep.subr.mxu0 0.0
  %89 = vmatpush1.msra.mxu0 0.0
  %90 = vmatprep.subr.mxu0 0.0
  %91 = vmatpush1.msra.mxu0 0.0
  %92 = vmatprep.subr.mxu0 0.0
  %93 = vmatpush1.msra.mxu0 0.0
  %94 = vmatprep.subr.mxu0 0.0
  %95 = vmatpush1.msra.mxu0 0.0
  %96 = vmatprep.subr.mxu0 0.0
  %97 = vmatpush1.msra.mxu0 0.0
  %98 = vmatprep.subr.mxu0 0.0
  %99 = vmatpush1.msra.mxu0 0.0
  %100 = vmatprep.subr.mxu0 0.0
  %101 = vmatpush1.msra.mxu0 0.0
  %102 = vmatprep.subr.mxu0 0.0
  %103 = vmatpush1.msra.mxu0 0.0
  %104 = vmatprep.subr.mxu0 0.0
  %105 = vmatpush1.msra.mxu0 0.0
  %106 = vmatprep.subr.mxu0 0.0
  %107 = vmatpush1.msra.mxu0 0.0
  %108 = vmatprep.subr.mxu0 0.0
  %109 = vmatpush1.msra.mxu0 0.0
  %110 = vmatprep.subr.mxu0 0.0
  %111 = vmatpush1.msra.mxu0 0.0
  %112 = vmatprep.subr.mxu0 0.0
  %113 = vmatpush1.msra.mxu0 0.0
  %114 = vmatprep.subr.mxu0 0.0
  %115 = vmatpush1.msra.mxu0 0.0
  %116 = vmatprep.subr.mxu0 0.0
  %117 = vmatpush1.msra.mxu0 0.0
  %118 = vmatprep.mubr.f32.mxu0 0.0
  %119 = vmatmul.mubr.f32.gmra.mrb[0].mxu0 %v35
  %v120 = vpop.f32.mrb[0].mxu0
  %v121 = vadd.f32 0.0, %v120
  %v122 = vpop.f32.mrb[0].mxu0
  %123 = vmatprep.mubr.f32.mxu0 0.0
  %124 = vmatmul.mubr.f32.gmra.mrb[0].mxu0 %v36
  %v125 = vpop.f32.mrb[0].mxu0
  %v126 = vadd.f32 0.0, %v125
  %v127 = vpop.f32.mrb[0].mxu0
  %128 = vmatprep.mubr.f32.mxu0 0.0
  %129 = vmatmul.mubr.f32.gmra.mrb[0].mxu0 %v37
  %v130 = vpop.f32.mrb[0].mxu0
  %v131 = vadd.f32 0.0, %v130
  %v132 = vpop.f32.mrb[0].mxu0
  %133 = vdwg.mxu0
  %v134 = vld [vmem:[%s2] sm:$0xff]
  %v135 = vld [vmem:[%s2 + $0x8] sm:$0xff]
  %v136 = vld [vmem:[%s2 + $0x10] sm:$0xff]
  %v137 = vld [vmem:[%s2 + $0x18] sm:$0xff]
  %v138 = vld [vmem:[%s2 + $0x40] sm:$0x1]
  %v139 = vlaneseq
  %v140 = vshrl.u32 %v139, 7
  %v141 = vsub.s32 0, %v140
  %v142 = vrot.slane %v138, %v141
  %vm143 = vcmask 261120
  %v145 = vsel %vm143, %v121, 0
  %v148 = vsel %vm143, %v126, 0
  %v151 = vsel %vm143, %v131, 0
  %153 = vmatprep.subr.mxu0 0.0
  %154 = vmatpush1.msra.mxu0 %v134
  %155 = vmatprep.subr.mxu0 0.0
  %156 = vmatpush1.msra.mxu0 %v135
  %157 = vmatprep.subr.mxu0 0.0
  %158 = vmatpush1.msra.mxu0 %v136
  %159 = vmatprep.subr.mxu0 0.0
  %160 = vmatpush1.msra.mxu0 %v137
  %161 = vmatprep.subr.mxu0 0.0
  %162 = vmatpush1.msra.mxu0 0.0
  %163 = vmatprep.subr.mxu0 0.0
  %164 = vmatpush1.msra.mxu0 0.0
  %165 = vmatprep.subr.mxu0 0.0
  %166 = vmatpush1.msra.mxu0 0.0
  %167 = vmatprep.subr.mxu0 0.0
  %168 = vmatpush1.msra.mxu0 0.0
  %169 = vmatprep.subr.mxu0 0.0
  %170 = vmatpush1.msra.mxu0 0.0
  %171 = vmatprep.subr.mxu0 0.0
  %172 = vmatpush1.msra.mxu0 0.0
  %173 = vmatprep.subr.mxu0 0.0
  %174 = vmatpush1.msra.mxu0 0.0
  %175 = vmatprep.subr.mxu0 0.0
  %176 = vmatpush1.msra.mxu0 0.0
  %177 = vmatprep.subr.mxu0 0.0
  %178 = vmatpush1.msra.mxu0 0.0
  %179 = vmatprep.subr.mxu0 0.0
  %180 = vmatpush1.msra.mxu0 0.0
  %181 = vmatprep.subr.mxu0 0.0
  %182 = vmatpush1.msra.mxu0 0.0
  %183 = vmatprep.subr.mxu0 0.0
  %184 = vmatpush1.msra.mxu0 0.0
  %185 = vmatprep.subr.mxu0 0.0
  %186 = vmatpush1.msra.mxu0 0.0
  %187 = vmatprep.subr.mxu0 0.0
  %188 = vmatpush1.msra.mxu0 0.0
  %189 = vmatprep.subr.mxu0 0.0
  %190 = vmatpush1.msra.mxu0 0.0
  %191 = vmatprep.subr.mxu0 0.0
  %192 = vmatpush1.msra.mxu0 0.0
  %193 = vmatprep.subr.mxu0 0.0
  %194 = vmatpush1.msra.mxu0 0.0
  %195 = vmatprep.subr.mxu0 0.0
  %196 = vmatpush1.msra.mxu0 0.0
  %197 = vmatprep.subr.mxu0 0.0
  %198 = vmatpush1.msra.mxu0 0.0
  %199 = vmatprep.subr.mxu0 0.0
  %200 = vmatpush1.msra.mxu0 0.0
  %201 = vmatprep.subr.mxu0 0.0
  %202 = vmatpush1.msra.mxu0 0.0
  %203 = vmatprep.subr.mxu0 0.0
  %204 = vmatpush1.msra.mxu0 0.0
  %205 = vmatprep.subr.mxu0 0.0
  %206 = vmatpush1.msra.mxu0 0.0
  %207 = vmatprep.subr.mxu0 0.0
  %208 = vmatpush1.msra.mxu0 0.0
  %209 = vmatprep.subr.mxu0 0.0
  %210 = vmatpush1.msra.mxu0 0.0
  %211 = vmatprep.subr.mxu0 0.0
  %212 = vmatpush1.msra.mxu0 0.0
  %213 = vmatprep.subr.mxu0 0.0
  %214 = vmatpush1.msra.mxu0 0.0
  %215 = vmatprep.subr.mxu0 0.0
  %216 = vmatpush1.msra.mxu0 0.0
  %217 = vmatprep.mubr.f32.mxu0 0.0
  %218 = vmatmul.mubr.f32.gmra.mrb[0].mxu0 %v145
  %v219 = vpop.f32.mrb[0].mxu0
  %v220 = vadd.f32 %v142, %v219
  %v221 = vpop.f32.mrb[0].mxu0
  %222 = vmatprep.mubr.f32.mxu0 0.0
  %223 = vmatmul.mubr.f32.gmra.mrb[0].mxu0 %v148
  %v224 = vpop.f32.mrb[0].mxu0
  %v225 = vadd.f32 %v142, %v224
  %v226 = vpop.f32.mrb[0].mxu0
  %227 = vmatprep.mubr.f32.mxu0 0.0
  %228 = vmatmul.mubr.f32.gmra.mrb[0].mxu0 %v151
  %v229 = vpop.f32.mrb[0].mxu0
  %v230 = vadd.f32 %v142, %v229
  %v231 = vpop.f32.mrb[0].mxu0
  %232 = vdwg.mxu0
  %v233 = vld [vmem:[%s2 + $0x20] sm:$0xff]
  %v234 = vld [vmem:[%s2 + $0x28] sm:$0xff]
  %v235 = vld [vmem:[%s2 + $0x30] sm:$0xff]
  %v236 = vld [vmem:[%s2 + $0x38] sm:$0xff]
  %v237 = vpack.c.bf16 %v234, %v233
  %v238 = vpack.c.bf16 %v236, %v235
  %v239 = vld [vmem:[%s2 + $0x48] sm:$0xff]
  %v240 = vld [vmem:[%s2 + $0x50] sm:$0xff]
  %v241 = vld [vmem:[%s2 + $0x58] sm:$0xff]
  %v242 = vld [vmem:[%s2 + $0x60] sm:$0xff]
  %v243 = vld [vmem:[%s2 + $0x68] sm:$0xff]
  %v244 = vld [vmem:[%s2 + $0x70] sm:$0xff]
  %v245 = vld [vmem:[%s2 + $0x78] sm:$0xff]
  %v246 = vld [vmem:[%s2 + $0x80] sm:$0xff]
  %v247 = vpack.c.bf16 %v240, %v239
  %v248 = vpack.c.bf16 %v242, %v241
  %v249 = vpack.c.bf16 %v244, %v243
  %v250 = vpack.c.bf16 %v246, %v245
  %v251 = vld [vmem:[%s2 + $0x88] sm:$0x1]
  %v253 = vsel %vm143, 0, 0
  %255 = vmatprep.subr.bf16.mxu0 0
  %256 = vmatpush1.bf16.msra.mxu0 %v237
  %257 = vmatprep.subr.bf16.mxu0 0
  %258 = vmatpush1.bf16.msra.mxu0 %v238
  %259 = vmatprep.subr.bf16.mxu0 0
  %260 = vmatpush1.bf16.msra.mxu0 0
  %261 = vmatprep.subr.bf16.mxu0 0
  %262 = vmatpush1.bf16.msra.mxu0 0
  %263 = vmatprep.subr.bf16.mxu0 0
  %264 = vmatpush1.bf16.msra.mxu0 0
  %265 = vmatprep.subr.bf16.mxu0 0
  %266 = vmatpush1.bf16.msra.mxu0 0
  %267 = vmatprep.subr.bf16.mxu0 0
  %268 = vmatpush1.bf16.msra.mxu0 0
  %269 = vmatprep.subr.bf16.mxu0 0
  %270 = vmatpush1.bf16.msra.mxu0 0
  %271 = vmatprep.subr.bf16.mxu0 0
  %272 = vmatpush1.bf16.msra.mxu0 0
  %273 = vmatprep.subr.bf16.mxu0 0
  %274 = vmatpush1.bf16.msra.mxu0 0
  %275 = vmatprep.subr.bf16.mxu0 0
  %276 = vmatpush1.bf16.msra.mxu0 0
  %277 = vmatprep.subr.bf16.mxu0 0
  %278 = vmatpush1.bf16.msra.mxu0 0
  %279 = vmatprep.subr.bf16.mxu0 0
  %280 = vmatpush1.bf16.msra.mxu0 0
  %281 = vmatprep.subr.bf16.mxu0 0
  %282 = vmatpush1.bf16.msra.mxu0 0
  %283 = vmatprep.subr.bf16.mxu0 0
  %284 = vmatpush1.bf16.msra.mxu0 0
  %285 = vmatprep.subr.bf16.mxu0 0
  %286 = vmatpush1.bf16.msra.mxu0 0
  %287 = vmatprep.mubr.bf16.mxu0 0
  %288 = vmatmul.mubr.bf16.gmra.mrb[0].mxu0 %v253
  %v289 = vpop.f32.mrb[0].mxu0
  %v290 = vadd.f32 0.0, %v289
  %v291 = vpop.f32.mrb[0].mxu0
  %v292 = vpop.f32.mrb[0].mxu0
  %v293 = vpop.f32.mrb[0].mxu0
  %294 = vdwg.mxu0
  %v295 = vadd.f32 %v220, %v290
  %v296 = vmul.f32 %v295, 0.5
  %v297 = vtanh.pop %v296
  %v298 = vadd.f32 %v297, 1.0
  %v299 = vmul.f32 %v298, 0.5
  %v300 = vmul.f32 %v299, 0.0
  %302 = vrot.lane.b32.xlu0 %v297, 64
  %v303 = vpop.permute.xlu0 %302
  %v305 = vmul.f32 %v299, %v303
  %307 = vrot.lane.b32.xlu0 %v305, 32
  %v308 = vpop.permute.xlu0 %307
  %v310 = vadd.f32 %v300, %v308
  %v311 = vtanh.pop %v310
  %313 = vrot.lane.b32.xlu0 %v311, 64
  %v314 = vpop.permute.xlu0 %313
  %v316 = vmul.f32 %v299, %v314
  %v317 = vpack.c.bf16 %v316, %v316
  %319 = vrot.lane.b32.xlu0 %v317, 32
  %v320 = vpop.permute.xlu0 %319
  %v322 = vsel %vm143, %v320, 0
  %324 = vmatprep.subr.bf16.mxu0 0
  %325 = vmatpush1.bf16.msra.mxu0 %v237
  %326 = vmatprep.subr.bf16.mxu0 0
  %327 = vmatpush1.bf16.msra.mxu0 %v238
  %328 = vmatprep.subr.bf16.mxu0 0
  %329 = vmatpush1.bf16.msra.mxu0 0
  %330 = vmatprep.subr.bf16.mxu0 0
  %331 = vmatpush1.bf16.msra.mxu0 0
  %332 = vmatprep.subr.bf16.mxu0 0
  %333 = vmatpush1.bf16.msra.mxu0 0
  %334 = vmatprep.subr.bf16.mxu0 0
  %335 = vmatpush1.bf16.msra.mxu0 0
  %336 = vmatprep.subr.bf16.mxu0 0
  %337 = vmatpush1.bf16.msra.mxu0 0
  %338 = vmatprep.subr.bf16.mxu0 0
  %339 = vmatpush1.bf16.msra.mxu0 0
  %340 = vmatprep.subr.bf16.mxu0 0
  %341 = vmatpush1.bf16.msra.mxu0 0
  %342 = vmatprep.subr.bf16.mxu0 0
  %343 = vmatpush1.bf16.msra.mxu0 0
  %344 = vmatprep.subr.bf16.mxu0 0
  %345 = vmatpush1.bf16.msra.mxu0 0
  %346 = vmatprep.subr.bf16.mxu0 0
  %347 = vmatpush1.bf16.msra.mxu0 0
  %348 = vmatprep.subr.bf16.mxu0 0
  %349 = vmatpush1.bf16.msra.mxu0 0
  %350 = vmatprep.subr.bf16.mxu0 0
  %351 = vmatpush1.bf16.msra.mxu0 0
  %352 = vmatprep.subr.bf16.mxu0 0
  %353 = vmatpush1.bf16.msra.mxu0 0
  %354 = vmatprep.subr.bf16.mxu0 0
  %355 = vmatpush1.bf16.msra.mxu0 0
  %356 = vmatprep.mubr.bf16.mxu0 0
  %357 = vmatmul.mubr.bf16.gmra.mrb[0].mxu0 %v322
  %v358 = vpop.f32.mrb[0].mxu0
  %v359 = vadd.f32 0.0, %v358
  %v360 = vpop.f32.mrb[0].mxu0
  %v361 = vpop.f32.mrb[0].mxu0
  %v362 = vpop.f32.mrb[0].mxu0
  %363 = vdwg.mxu0
  %v365 = vrot.slane %v359, 6
  %v367 = vadd.f32 %v220, %v365
  %v368 = vmul.f32 %v367, 0.5
  %v369 = vtanh.pop %v368
  %v370 = vadd.f32 %v369, 1.0
  %v371 = vmul.f32 %v370, 0.5
  %v373 = vrot.slane %v310, 6
  %v375 = vmul.f32 %v371, %v373
  %377 = vrot.lane.b32.xlu0 %v369, 64
  %v378 = vpop.permute.xlu0 %377
  %v380 = vmul.f32 %v371, %v378
  %382 = vrot.lane.b32.xlu0 %v380, 32
  %v383 = vpop.permute.xlu0 %382
  %v385 = vadd.f32 %v375, %v383
  %v386 = vtanh.pop %v385
  %388 = vrot.lane.b32.xlu0 %v386, 64
  %v389 = vpop.permute.xlu0 %388
  %v391 = vmul.f32 %v371, %v389
  %v392 = vpack.c.bf16 %v391, %v391
  %v393 = vsel %vm143, %v320, 0
  %v394 = vlaneseq
  %v395 = vshrl.u32 %v394, 7
  %v396 = vsub.s32 0, %v395
  %v397 = vrot.slane %v251, %v396
  %vm398 = vcmask 523264
  %v399 = vsel %vm398, %v393, 0
  %401 = vmatprep.subr.bf16.mxu0 0
  %402 = vmatpush1.bf16.msra.mxu0 %v247
  %403 = vmatprep.subr.bf16.mxu0 0
  %404 = vmatpush1.bf16.msra.mxu0 %v248
  %405 = vmatprep.subr.bf16.mxu0 0
  %406 = vmatpush1.bf16.msra.mxu0 %v249
  %407 = vmatprep.subr.bf16.mxu0 0
  %408 = vmatpush1.bf16.msra.mxu0 %v250
  %409 = vmatprep.subr.bf16.mxu0 0
  %410 = vmatpush1.bf16.msra.mxu0 0
  %411 = vmatprep.subr.bf16.mxu0 0
  %412 = vmatpush1.bf16.msra.mxu0 0
  %413 = vmatprep.subr.bf16.mxu0 0
  %414 = vmatpush1.bf16.msra.mxu0 0
  %415 = vmatprep.subr.bf16.mxu0 0
  %416 = vmatpush1.bf16.msra.mxu0 0
  %417 = vmatprep.subr.bf16.mxu0 0
  %418 = vmatpush1.bf16.msra.mxu0 0
  %419 = vmatprep.subr.bf16.mxu0 0
  %420 = vmatpush1.bf16.msra.mxu0 0
  %421 = vmatprep.subr.bf16.mxu0 0
  %422 = vmatpush1.bf16.msra.mxu0 0
  %423 = vmatprep.subr.bf16.mxu0 0
  %424 = vmatpush1.bf16.msra.mxu0 0
  %425 = vmatprep.subr.bf16.mxu0 0
  %426 = vmatpush1.bf16.msra.mxu0 0
  %427 = vmatprep.subr.bf16.mxu0 0
  %428 = vmatpush1.bf16.msra.mxu0 0
  %429 = vmatprep.subr.bf16.mxu0 0
  %430 = vmatpush1.bf16.msra.mxu0 0
  %431 = vmatprep.subr.bf16.mxu0 0
  %432 = vmatpush1.bf16.msra.mxu0 0
  %433 = vmatprep.mubr.bf16.mxu0 0
  %434 = vmatmul.mubr.bf16.gmra.mrb[0].mxu0 %v399
  %v435 = vpop.f32.mrb[0].mxu0
  %v436 = vadd.f32 %v397, %v435
  %v437 = vpop.f32.mrb[0].mxu0
  %v438 = vpop.f32.mrb[0].mxu0
  %v439 = vpop.f32.mrb[0].mxu0
  %440 = vdwg.mxu0
  %v441 = vmul.f32 %v436, 0.5
  %v442 = vtanh.pop %v441
  %v443 = vadd.f32 %v442, 1.0
  %v444 = vmul.f32 %v443, 0.5
  %v445 = vmul.f32 %v444, 0.0
  %447 = vrot.lane.b32.xlu0 %v442, 64
  %v448 = vpop.permute.xlu0 %447
  %v450 = vmul.f32 %v444, %v448
  %452 = vrot.lane.b32.xlu0 %v450, 32
  %v453 = vpop.permute.xlu0 %452
  %v455 = vadd.f32 %v445, %v453
  %v456 = vtanh.pop %v455
  %458 = vrot.lane.b32.xlu0 %v456, 64
  %v459 = vpop.permute.xlu0 %458
  %v461 = vmul.f32 %v444, %v459
  %v462 = vpack.c.bf16 %v461, %v461
  %v464 = vrot.slane %v392, 1
  %465 = vrot.lane.b32.xlu0 %v464, 32
  %v466 = vpop.permute.xlu0 %465
  %v468 = vsel %vm143, %v466, 0
  %470 = vmatprep.subr.bf16.mxu0 0
  %471 = vmatpush1.bf16.msra.mxu0 %v237
  %472 = vmatprep.subr.bf16.mxu0 0
  %473 = vmatpush1.bf16.msra.mxu0 %v238
  %474 = vmatprep.subr.bf16.mxu0 0
  %475 = vmatpush1.bf16.msra.mxu0 0
  %476 = vmatprep.subr.bf16.mxu0 0
  %477 = vmatpush1.bf16.msra.mxu0 0
  %478 = vmatprep.subr.bf16.mxu0 0
  %479 = vmatpush1.bf16.msra.mxu0 0
  %480 = vmatprep.subr.bf16.mxu0 0
  %481 = vmatpush1.bf16.msra.mxu0 0
  %482 = vmatprep.subr.bf16.mxu0 0
  %483 = vmatpush1.bf16.msra.mxu0 0
  %484 = vmatprep.subr.bf16.mxu0 0
  %485 = vmatpush1.bf16.msra.mxu0 0
  %486 = vmatprep.subr.bf16.mxu0 0
  %487 = vmatpush1.bf16.msra.mxu0 0
  %488 = vmatprep.subr.bf16.mxu0 0
  %489 = vmatpush1.bf16.msra.mxu0 0
  %490 = vmatprep.subr.bf16.mxu0 0
  %491 = vmatpush1.bf16.msra.mxu0 0
  %492 = vmatprep.subr.bf16.mxu0 0
  %493 = vmatpush1.bf16.msra.mxu0 0
  %494 = vmatprep.subr.bf16.mxu0 0
  %495 = vmatpush1.bf16.msra.mxu0 0
  %496 = vmatprep.subr.bf16.mxu0 0
  %497 = vmatpush1.bf16.msra.mxu0 0
  %498 = vmatprep.subr.bf16.mxu0 0
  %499 = vmatpush1.bf16.msra.mxu0 0
  %500 = vmatprep.subr.bf16.mxu0 0
  %501 = vmatpush1.bf16.msra.mxu0 0
  %502 = vmatprep.mubr.bf16.mxu0 0
  %503 = vmatmul.mubr.bf16.gmra.mrb[0].mxu0 %v468
  %v504 = vpop.f32.mrb[0].mxu0
  %v505 = vadd.f32 0.0, %v504
  %v506 = vpop.f32.mrb[0].mxu0
  %v507 = vpop.f32.mrb[0].mxu0
  %v508 = vpop.f32.mrb[0].mxu0
  %509 = vdwg.mxu0
  %v511 = vrot.slane %v505, 4
  %v513 = vadd.f32 %v220, %v511
  %v514 = vmul.f32 %v513, 0.5
  %v515 = vtanh.pop %v514
  %v516 = vadd.f32 %v515, 1.0
  %v517 = vmul.f32 %v516, 0.5
  %v519 = vrot.slane %v385, 6
  %v521 = vmul.f32 %v517, %v519
  %523 = vrot.lane.b32.xlu0 %v515, 64
  %v524 = vpop.permute.xlu0 %523
  %v526 = vmul.f32 %v517, %v524
  %528 = vrot.lane.b32.xlu0 %v526, 32
  %v529 = vpop.permute.xlu0 %528
  %v531 = vadd.f32 %v521, %v529
  %v532 = vtanh.pop %v531
  %534 = vrot.lane.b32.xlu0 %v532, 64
  %v535 = vpop.permute.xlu0 %534
  %v537 = vmul.f32 %v517, %v535
  %v538 = vpack.c.bf16 %v537, %v537
  %539 = vrot.lane.b32.xlu0 %v392, 32
  %v540 = vpop.permute.xlu0 %539
  %v542 = vrot.slane %v462, 7
  %543 = vrot.lane.b32.xlu0 %v542, 64
  %v544 = vpop.permute.xlu0 %543
  %v547 = vsel %vm143, %v540, %v544
  %v549 = vrot.slane %v547, 1
  %v551 = vsel %vm398, %v549, 0
  %553 = vmatprep.subr.bf16.mxu0 0
  %554 = vmatpush1.bf16.msra.mxu0 %v247
  %555 = vmatprep.subr.bf16.mxu0 0
  %556 = vmatpush1.bf16.msra.mxu0 %v248
  %557 = vmatprep.subr.bf16.mxu0 0
  %558 = vmatpush1.bf16.msra.mxu0 %v249
  %559 = vmatprep.subr.bf16.mxu0 0
  %560 = vmatpush1.bf16.msra.mxu0 %v250
  %561 = vmatprep.subr.bf16.mxu0 0
  %562 = vmatpush1.bf16.msra.mxu0 0
  %563 = vmatprep.subr.bf16.mxu0 0
  %564 = vmatpush1.bf16.msra.mxu0 0
  %565 = vmatprep.subr.bf16.mxu0 0
  %566 = vmatpush1.bf16.msra.mxu0 0
  %567 = vmatprep.subr.bf16.mxu0 0
  %568 = vmatpush1.bf16.msra.mxu0 0
  %569 = vmatprep.subr.bf16.mxu0 0
  %570 = vmatpush1.bf16.msra.mxu0 0
  %571 = vmatprep.subr.bf16.mxu0 0
  %572 = vmatpush1.bf16.msra.mxu0 0
  %573 = vmatprep.subr.bf16.mxu0 0
  %574 = vmatpush1.bf16.msra.mxu0 0
  %575 = vmatprep.subr.bf16.mxu0 0
  %576 = vmatpush1.bf16.msra.mxu0 0
  %577 = vmatprep.subr.bf16.mxu0 0
  %578 = vmatpush1.bf16.msra.mxu0 0
  %579 = vmatprep.subr.bf16.mxu0 0
  %580 = vmatpush1.bf16.msra.mxu0 0
  %581 = vmatprep.subr.bf16.mxu0 0
  %582 = vmatpush1.bf16.msra.mxu0 0
  %583 = vmatprep.subr.bf16.mxu0 0
  %584 = vmatpush1.bf16.msra.mxu0 0
  %585 = vmatprep.mubr.bf16.mxu0 0
  %586 = vmatmul.mubr.bf16.gmra.mrb[0].mxu0 %v551
  %v587 = vpop.f32.mrb[0].mxu0
  %v588 = vadd.f32 %v397, %v587
  %v589 = vpop.f32.mrb[0].mxu0
  %v590 = vpop.f32.mrb[0].mxu0
  %v591 = vpop.f32.mrb[0].mxu0
  %592 = vdwg.mxu0
  %v593 = vmul.f32 %v588, 0.5
  %v594 = vtanh.pop %v593
  %v595 = vadd.f32 %v594, 1.0
  %v596 = vmul.f32 %v595, 0.5
  %v597 = vmul.f32 %v596, %v455
  %599 = vrot.lane.b32.xlu0 %v594, 64
  %v600 = vpop.permute.xlu0 %599
  %v602 = vmul.f32 %v596, %v600
  %604 = vrot.lane.b32.xlu0 %v602, 32
  %v605 = vpop.permute.xlu0 %604
  %v607 = vadd.f32 %v597, %v605
  %v608 = vtanh.pop %v607
  %610 = vrot.lane.b32.xlu0 %v608, 64
  %v611 = vpop.permute.xlu0 %610
  %v613 = vmul.f32 %v596, %v611
  %v614 = vpack.c.bf16 %v613, %v613
  %v616 = vrot.slane %v538, 2
  %617 = vrot.lane.b32.xlu0 %v616, 32
  %v618 = vpop.permute.xlu0 %617
  %v620 = vsel %vm143, %v618, 0
  %622 = vmatprep.subr.bf16.mxu0 0
  %623 = vmatpush1.bf16.msra.mxu0 %v237
  %624 = vmatprep.subr.bf16.mxu0 0
  %625 = vmatpush1.bf16.msra.mxu0 %v238
  %626 = vmatprep.subr.bf16.mxu0 0
  %627 = vmatpush1.bf16.msra.mxu0 0
  %628 = vmatprep.subr.bf16.mxu0 0
  %629 = vmatpush1.bf16.msra.mxu0 0
  %630 = vmatprep.subr.bf16.mxu0 0
  %631 = vmatpush1.bf16.msra.mxu0 0
  %632 = vmatprep.subr.bf16.mxu0 0
  %633 = vmatpush1.bf16.msra.mxu0 0
  %634 = vmatprep.subr.bf16.mxu0 0
  %635 = vmatpush1.bf16.msra.mxu0 0
  %636 = vmatprep.subr.bf16.mxu0 0
  %637 = vmatpush1.bf16.msra.mxu0 0
  %638 = vmatprep.subr.bf16.mxu0 0
  %639 = vmatpush1.bf16.msra.mxu0 0
  %640 = vmatprep.subr.bf16.mxu0 0
  %641 = vmatpush1.bf16.msra.mxu0 0
  %642 = vmatprep.subr.bf16.mxu0 0
  %643 = vmatpush1.bf16.msra.mxu0 0
  %644 = vmatprep.subr.bf16.mxu0 0
  %645 = vmatpush1.bf16.msra.mxu0 0
  %646 = vmatprep.subr.bf16.mxu0 0
  %647 = vmatpush1.bf16.msra.mxu0 0
  %648 = vmatprep.subr.bf16.mxu0 0
  %649 = vmatpush1.bf16.msra.mxu0 0
  %650 = vmatprep.subr.bf16.mxu0 0
  %651 = vmatpush1.bf16.msra.mxu0 0
  %652 = vmatprep.subr.bf16.mxu0 0
  %653 = vmatpush1.bf16.msra.mxu0 0
  %654 = vmatprep.mubr.bf16.mxu0 0
  %655 = vmatmul.mubr.bf16.gmra.mrb[0].mxu0 %v620
  %v656 = vpop.f32.mrb[0].mxu0
  %v657 = vadd.f32 0.0, %v656
  %v658 = vpop.f32.mrb[0].mxu0
  %v659 = vpop.f32.mrb[0].mxu0
  %v660 = vpop.f32.mrb[0].mxu0
  %661 = vdwg.mxu0
  %v663 = vrot.slane %v657, 2
  %v665 = vadd.f32 %v220, %v663
  %v666 = vmul.f32 %v665, 0.5
  %v667 = vtanh.pop %v666
  %v668 = vadd.f32 %v667, 1.0
  %v669 = vmul.f32 %v668, 0.5
  %v671 = vrot.slane %v531, 6
  %v673 = vmul.f32 %v669, %v671
  %675 = vrot.lane.b32.xlu0 %v667, 64
  %v676 = vpop.permute.xlu0 %675
  %v678 = vmul.f32 %v669, %v676
  %680 = vrot.lane.b32.xlu0 %v678, 32
  %v681 = vpop.permute.xlu0 %680
  %v683 = vadd.f32 %v673, %v681
  %v684 = vtanh.pop %v683
  %686 = vrot.lane.b32.xlu0 %v684, 64
  %v687 = vpop.permute.xlu0 %686
  %v689 = vmul.f32 %v669, %v687
  %v690 = vpack.c.bf16 %v689, %v689
  %691 = vrot.lane.b32.xlu0 %v538, 32
  %v692 = vpop.permute.xlu0 %691
  %v694 = vrot.slane %v614, 6
  %695 = vrot.lane.b32.xlu0 %v694, 64
  %v696 = vpop.permute.xlu0 %695
  %v699 = vsel %vm143, %v692, %v696
  %v701 = vrot.slane %v699, 2
  %v703 = vsel %vm398, %v701, 0
  %705 = vmatprep.subr.bf16.mxu0 0
  %706 = vmatpush1.bf16.msra.mxu0 %v247
  %707 = vmatprep.subr.bf16.mxu0 0
  %708 = vmatpush1.bf16.msra.mxu0 %v248
  %709 = vmatprep.subr.bf16.mxu0 0
  %710 = vmatpush1.bf16.msra.mxu0 %v249
  %711 = vmatprep.subr.bf16.mxu0 0
  %712 = vmatpush1.bf16.msra.mxu0 %v250
  %713 = vmatprep.subr.bf16.mxu0 0
  %714 = vmatpush1.bf16.msra.mxu0 0
  %715 = vmatprep.subr.bf16.mxu0 0
  %716 = vmatpush1.bf16.msra.mxu0 0
  %717 = vmatprep.subr.bf16.mxu0 0
  %718 = vmatpush1.bf16.msra.mxu0 0
  %719 = vmatprep.subr.bf16.mxu0 0
  %720 = vmatpush1.bf16.msra.mxu0 0
  %721 = vmatprep.subr.bf16.mxu0 0
  %722 = vmatpush1.bf16.msra.mxu0 0
  %723 = vmatprep.subr.bf16.mxu0 0
  %724 = vmatpush1.bf16.msra.mxu0 0
  %725 = vmatprep.subr.bf16.mxu0 0
  %726 = vmatpush1.bf16.msra.mxu0 0
  %727 = vmatprep.subr.bf16.mxu0 0
  %728 = vmatpush1.bf16.msra.mxu0 0
  %729 = vmatprep.subr.bf16.mxu0 0
  %730 = vmatpush1.bf16.msra.mxu0 0
  %731 = vmatprep.subr.bf16.mxu0 0
  %732 = vmatpush1.bf16.msra.mxu0 0
  %733 = vmatprep.subr.bf16.mxu0 0
  %734 = vmatpush1.bf16.msra.mxu0 0
  %735 = vmatprep.subr.bf16.mxu0 0
  %736 = vmatpush1.bf16.msra.mxu0 0
  %737 = vmatprep.mubr.bf16.mxu0 0
  %738 = vmatmul.mubr.bf16.gmra.mrb[0].mxu0 %v703
  %v739 = vpop.f32.mrb[0].mxu0
  %v740 = vadd.f32 %v397, %v739
  %v741 = vpop.f32.mrb[0].mxu0
  %v742 = vpop.f32.mrb[0].mxu0
  %v743 = vpop.f32.mrb[0].mxu0
  %744 = vdwg.mxu0
  %v745 = vmul.f32 %v740, 0.5
  %v746 = vtanh.pop %v745
  %v747 = vadd.f32 %v746, 1.0
  %v748 = vmul.f32 %v747, 0.5
  %v749 = vmul.f32 %v748, %v607
  %751 = vrot.lane.b32.xlu0 %v746, 64
  %v752 = vpop.permute.xlu0 %751
  %v754 = vmul.f32 %v748, %v752
  %756 = vrot.lane.b32.xlu0 %v754, 32
  %v757 = vpop.permute.xlu0 %756
  %v759 = vadd.f32 %v749, %v757
  %v760 = vtanh.pop %v759
  %762 = vrot.lane.b32.xlu0 %v760, 64
  %v763 = vpop.permute.xlu0 %762
  %v765 = vmul.f32 %v748, %v763
  %v766 = vpack.c.bf16 %v765, %v765
  %v768 = vrot.slane %v690, 3
  %769 = vrot.lane.b32.xlu0 %v768, 32
  %v770 = vpop.permute.xlu0 %769
  %v772 = vsel %vm143, %v770, 0
  %774 = vmatprep.subr.bf16.mxu0 0
  %775 = vmatpush1.bf16.msra.mxu0 %v237
  %776 = vmatprep.subr.bf16.mxu0 0
  %777 = vmatpush1.bf16.msra.mxu0 %v238
  %778 = vmatprep.subr.bf16.mxu0 0
  %779 = vmatpush1.bf16.msra.mxu0 0
  %780 = vmatprep.subr.bf16.mxu0 0
  %781 = vmatpush1.bf16.msra.mxu0 0
  %782 = vmatprep.subr.bf16.mxu0 0
  %783 = vmatpush1.bf16.msra.mxu0 0
  %784 = vmatprep.subr.bf16.mxu0 0
  %785 = vmatpush1.bf16.msra.mxu0 0
  %786 = vmatprep.subr.bf16.mxu0 0
  %787 = vmatpush1.bf16.msra.mxu0 0
  %788 = vmatprep.subr.bf16.mxu0 0
  %789 = vmatpush1.bf16.msra.mxu0 0
  %790 = vmatprep.subr.bf16.mxu0 0
  %791 = vmatpush1.bf16.msra.mxu0 0
  %792 = vmatprep.subr.bf16.mxu0 0
  %793 = vmatpush1.bf16.msra.mxu0 0
  %794 = vmatprep.subr.bf16.mxu0 0
  %795 = vmatpush1.bf16.msra.mxu0 0
  %796 = vmatprep.subr.bf16.mxu0 0
  %797 = vmatpush1.bf16.msra.mxu0 0
  %798 = vmatprep.subr.bf16.mxu0 0
  %799 = vmatpush1.bf16.msra.mxu0 0
  %800 = vmatprep.subr.bf16.mxu0 0
  %801 = vmatpush1.bf16.msra.mxu0 0
  %802 = vmatprep.subr.bf16.mxu0 0
  %803 = vmatpush1.bf16.msra.mxu0 0
  %804 = vmatprep.subr.bf16.mxu0 0
  %805 = vmatpush1.bf16.msra.mxu0 0
  %806 = vmatprep.mubr.bf16.mxu0 0
  %807 = vmatmul.mubr.bf16.gmra.mrb[0].mxu0 %v772
  %v808 = vpop.f32.mrb[0].mxu0
  %v809 = vadd.f32 0.0, %v808
  %v810 = vpop.f32.mrb[0].mxu0
  %v811 = vpop.f32.mrb[0].mxu0
  %v812 = vpop.f32.mrb[0].mxu0
  %813 = vdwg.mxu0
  %v814 = vadd.f32 %v225, %v809
  %v815 = vmul.f32 %v814, 0.5
  %v816 = vtanh.pop %v815
  %v817 = vadd.f32 %v816, 1.0
  %v818 = vmul.f32 %v817, 0.5
  %v820 = vrot.slane %v683, 6
  %v822 = vmul.f32 %v818, %v820
  %824 = vrot.lane.b32.xlu0 %v816, 64
  %v825 = vpop.permute.xlu0 %824
  %v827 = vmul.f32 %v818, %v825
  %829 = vrot.lane.b32.xlu0 %v827, 32
  %v830 = vpop.permute.xlu0 %829
  %v832 = vadd.f32 %v822, %v830
  %v833 = vtanh.pop %v832
  %835 = vrot.lane.b32.xlu0 %v833, 64
  %v836 = vpop.permute.xlu0 %835
  %v838 = vmul.f32 %v818, %v836
  %v839 = vpack.c.bf16 %v838, %v838
  %840 = vrot.lane.b32.xlu0 %v690, 32
  %v841 = vpop.permute.xlu0 %840
  %v843 = vrot.slane %v766, 5
  %844 = vrot.lane.b32.xlu0 %v843, 64
  %v845 = vpop.permute.xlu0 %844
  %v848 = vsel %vm143, %v841, %v845
  %v850 = vrot.slane %v848, 3
  %v852 = vsel %vm398, %v850, 0
  %854 = vmatprep.subr.bf16.mxu0 0
  %855 = vmatpush1.bf16.msra.mxu0 %v247
  %856 = vmatprep.subr.bf16.mxu0 0
  %857 = vmatpush1.bf16.msra.mxu0 %v248
  %858 = vmatprep.subr.bf16.mxu0 0
  %859 = vmatpush1.bf16.msra.mxu0 %v249
  %860 = vmatprep.subr.bf16.mxu0 0
  %861 = vmatpush1.bf16.msra.mxu0 %v250
  %862 = vmatprep.subr.bf16.mxu0 0
  %863 = vmatpush1.bf16.msra.mxu0 0
  %864 = vmatprep.subr.bf16.mxu0 0
  %865 = vmatpush1.bf16.msra.mxu0 0
  %866 = vmatprep.subr.bf16.mxu0 0
  %867 = vmatpush1.bf16.msra.mxu0 0
  %868 = vmatprep.subr.bf16.mxu0 0
  %869 = vmatpush1.bf16.msra.mxu0 0
  %870 = vmatprep.subr.bf16.mxu0 0
  %871 = vmatpush1.bf16.msra.mxu0 0
  %872 = vmatprep.subr.bf16.mxu0 0
  %873 = vmatpush1.bf16.msra.mxu0 0
  %874 = vmatprep.subr.bf16.mxu0 0
  %875 = vmatpush1.bf16.msra.mxu0 0
  %876 = vmatprep.subr.bf16.mxu0 0
  %877 = vmatpush1.bf16.msra.mxu0 0
  %878 = vmatprep.subr.bf16.mxu0 0
  %879 = vmatpush1.bf16.msra.mxu0 0
  %880 = vmatprep.subr.bf16.mxu0 0
  %881 = vmatpush1.bf16.msra.mxu0 0
  %882 = vmatprep.subr.bf16.mxu0 0
  %883 = vmatpush1.bf16.msra.mxu0 0
  %884 = vmatprep.subr.bf16.mxu0 0
  %885 = vmatpush1.bf16.msra.mxu0 0
  %886 = vmatprep.mubr.bf16.mxu0 0
  %887 = vmatmul.mubr.bf16.gmra.mrb[0].mxu0 %v852
  %v888 = vpop.f32.mrb[0].mxu0
  %v889 = vadd.f32 %v397, %v888
  %v890 = vpop.f32.mrb[0].mxu0
  %v891 = vpop.f32.mrb[0].mxu0
  %v892 = vpop.f32.mrb[0].mxu0
  %893 = vdwg.mxu0
  %v894 = vmul.f32 %v889, 0.5
  %v895 = vtanh.pop %v894
  %v896 = vadd.f32 %v895, 1.0
  %v897 = vmul.f32 %v896, 0.5
  %v898 = vmul.f32 %v897, %v759
  %900 = vrot.lane.b32.xlu0 %v895, 64
  %v901 = vpop.permute.xlu0 %900
  %v903 = vmul.f32 %v897, %v901
  %905 = vrot.lane.b32.xlu0 %v903, 32
  %v906 = vpop.permute.xlu0 %905
  %v908 = vadd.f32 %v898, %v906
  %v909 = vtanh.pop %v908
  %911 = vrot.lane.b32.xlu0 %v909, 64
  %v912 = vpop.permute.xlu0 %911
  %v914 = vmul.f32 %v897, %v912
  %v915 = vpack.c.bf16 %v914, %v914
  %917 = vrot.lane.b32.xlu0 %v839, 32
  %v918 = vpop.permute.xlu0 %917
  %v920 = vsel %vm143, %v918, 0
  %922 = vmatprep.subr.bf16.mxu0 0
  %923 = vmatpush1.bf16.msra.mxu0 %v237
  %924 = vmatprep.subr.bf16.mxu0 0
  %925 = vmatpush1.bf16.msra.mxu0 %v238
  %926 = vmatprep.subr.bf16.mxu0 0
  %927 = vmatpush1.bf16.msra.mxu0 0
  %928 = vmatprep.subr.bf16.mxu0 0
  %929 = vmatpush1.bf16.msra.mxu0 0
  %930 = vmatprep.subr.bf16.mxu0 0
  %931 = vmatpush1.bf16.msra.mxu0 0
  %932 = vmatprep.subr.bf16.mxu0 0
  %933 = vmatpush1.bf16.msra.mxu0 0
  %934 = vmatprep.subr.bf16.mxu0 0
  %935 = vmatpush1.bf16.msra.mxu0 0
  %936 = vmatprep.subr.bf16.mxu0 0
  %937 = vmatpush1.bf16.msra.mxu0 0
  %938 = vmatprep.subr.bf16.mxu0 0
  %939 = vmatpush1.bf16.msra.mxu0 0
  %940 = vmatprep.subr.bf16.mxu0 0
  %941 = vmatpush1.bf16.msra.mxu0 0
  %942 = vmatprep.subr.bf16.mxu0 0
  %943 = vmatpush1.bf16.msra.mxu0 0
  %944 = vmatprep.subr.bf16.mxu0 0
  %945 = vmatpush1.bf16.msra.mxu0 0
  %946 = vmatprep.subr.bf16.mxu0 0
  %947 = vmatpush1.bf16.msra.mxu0 0
  %948 = vmatprep.subr.bf16.mxu0 0
  %949 = vmatpush1.bf16.msra.mxu0 0
  %950 = vmatprep.subr.bf16.mxu0 0
  %951 = vmatpush1.bf16.msra.mxu0 0
  %952 = vmatprep.subr.bf16.mxu0 0
  %953 = vmatpush1.bf16.msra.mxu0 0
  %954 = vmatprep.mubr.bf16.mxu0 0
  %955 = vmatmul.mubr.bf16.gmra.mrb[0].mxu0 %v920
  %v956 = vpop.f32.mrb[0].mxu0
  %v957 = vadd.f32 0.0, %v956
  %v958 = vpop.f32.mrb[0].mxu0
  %v959 = vpop.f32.mrb[0].mxu0
  %v960 = vpop.f32.mrb[0].mxu0
  %961 = vdwg.mxu0
  %v963 = vrot.slane %v957, 6
  %v965 = vadd.f32 %v225, %v963
  %v966 = vmul.f32 %v965, 0.5
  %v967 = vtanh.pop %v966
  %v968 = vadd.f32 %v967, 1.0
  %v969 = vmul.f32 %v968, 0.5
  %v971 = vrot.slane %v832, 6
  %v973 = vmul.f32 %v969, %v971
  %975 = vrot.lane.b32.xlu0 %v967, 64
  %v976 = vpop.permute.xlu0 %975
  %v978 = vmul.f32 %v969, %v976
  %980 = vrot.lane.b32.xlu0 %v978, 32
  %v981 = vpop.permute.xlu0 %980
  %v983 = vadd.f32 %v973, %v981
  %v984 = vtanh.pop %v983
  %986 = vrot.lane.b32.xlu0 %v984, 64
  %v987 = vpop.permute.xlu0 %986
  %v989 = vmul.f32 %v969, %v987
  %v990 = vpack.c.bf16 %v989, %v989
  %992 = vrot.lane.b32.xlu0 %v915, 64
  %v993 = vpop.permute.xlu0 %992
  %v995 = vsel %vm143, %v918, %v993
  %v996 = vsel %vm398, %v995, 0
  %998 = vmatprep.subr.bf16.mxu0 0
  %999 = vmatpush1.bf16.msra.mxu0 %v247
  %1000 = vmatprep.subr.bf16.mxu0 0
  %1001 = vmatpush1.bf16.msra.mxu0 %v248
  %1002 = vmatprep.subr.bf16.mxu0 0
  %1003 = vmatpush1.bf16.msra.mxu0 %v249
  %1004 = vmatprep.subr.bf16.mxu0 0
  %1005 = vmatpush1.bf16.msra.mxu0 %v250
  %1006 = vmatprep.subr.bf16.mxu0 0
  %1007 = vmatpush1.bf16.msra.mxu0 0
  %1008 = vmatprep.subr.bf16.mxu0 0
  %1009 = vmatpush1.bf16.msra.mxu0 0
  %1010 = vmatprep.subr.bf16.mxu0 0
  %1011 = vmatpush1.bf16.msra.mxu0 0
  %1012 = vmatprep.subr.bf16.mxu0 0
  %1013 = vmatpush1.bf16.msra.mxu0 0
  %1014 = vmatprep.subr.bf16.mxu0 0
  %1015 = vmatpush1.bf16.msra.mxu0 0
  %1016 = vmatprep.subr.bf16.mxu0 0
  %1017 = vmatpush1.bf16.msra.mxu0 0
  %1018 = vmatprep.subr.bf16.mxu0 0
  %1019 = vmatpush1.bf16.msra.mxu0 0
  %1020 = vmatprep.subr.bf16.mxu0 0
  %1021 = vmatpush1.bf16.msra.mxu0 0
  %1022 = vmatprep.subr.bf16.mxu0 0
  %1023 = vmatpush1.bf16.msra.mxu0 0
  %1024 = vmatprep.subr.bf16.mxu0 0
  %1025 = vmatpush1.bf16.msra.mxu0 0
  %1026 = vmatprep.subr.bf16.mxu0 0
  %1027 = vmatpush1.bf16.msra.mxu0 0
  %1028 = vmatprep.subr.bf16.mxu0 0
  %1029 = vmatpush1.bf16.msra.mxu0 0
  %1030 = vmatprep.mubr.bf16.mxu0 0
  %1031 = vmatmul.mubr.bf16.gmra.mrb[0].mxu0 %v996
  %v1032 = vpop.f32.mrb[0].mxu0
  %v1033 = vadd.f32 %v397, %v1032
  %v1034 = vpop.f32.mrb[0].mxu0
  %v1035 = vpop.f32.mrb[0].mxu0
  %v1036 = vpop.f32.mrb[0].mxu0
  %1037 = vdwg.mxu0
  %v1038 = vmul.f32 %v1033, 0.5
  %v1039 = vtanh.pop %v1038
  %v1040 = vadd.f32 %v1039, 1.0
  %v1041 = vmul.f32 %v1040, 0.5
  %v1042 = vmul.f32 %v1041, %v908
  %1044 = vrot.lane.b32.xlu0 %v1039, 64
  %v1045 = vpop.permute.xlu0 %1044
  %v1047 = vmul.f32 %v1041, %v1045
  %1049 = vrot.lane.b32.xlu0 %v1047, 32
  %v1050 = vpop.permute.xlu0 %1049
  %v1052 = vadd.f32 %v1042, %v1050
  %v1053 = vtanh.pop %v1052
  %1055 = vrot.lane.b32.xlu0 %v1053, 64
  %v1056 = vpop.permute.xlu0 %1055
  %v1058 = vmul.f32 %v1041, %v1056
  %v1059 = vpack.c.bf16 %v1058, %v1058
  %v1061 = vrot.slane %v990, 1
  %1062 = vrot.lane.b32.xlu0 %v1061, 32
  %v1063 = vpop.permute.xlu0 %1062
  %v1065 = vsel %vm143, %v1063, 0
  %1067 = vmatprep.subr.bf16.mxu0 0
  %1068 = vmatpush1.bf16.msra.mxu0 %v237
  %1069 = vmatprep.subr.bf16.mxu0 0
  %1070 = vmatpush1.bf16.msra.mxu0 %v238
  %1071 = vmatprep.subr.bf16.mxu0 0
  %1072 = vmatpush1.bf16.msra.mxu0 0
  %1073 = vmatprep.subr.bf16.mxu0 0
  %1074 = vmatpush1.bf16.msra.mxu0 0
  %1075 = vmatprep.subr.bf16.mxu0 0
  %1076 = vmatpush1.bf16.msra.mxu0 0
  %1077 = vmatprep.subr.bf16.mxu0 0
  %1078 = vmatpush1.bf16.msra.mxu0 0
  %1079 = vmatprep.subr.bf16.mxu0 0
  %1080 = vmatpush1.bf16.msra.mxu0 0
  %1081 = vmatprep.subr.bf16.mxu0 0
  %1082 = vmatpush1.bf16.msra.mxu0 0
  %1083 = vmatprep.subr.bf16.mxu0 0
  %1084 = vmatpush1.bf16.msra.mxu0 0
  %1085 = vmatprep.subr.bf16.mxu0 0
  %1086 = vmatpush1.bf16.msra.mxu0 0
  %1087 = vmatprep.subr.bf16.mxu0 0
  %1088 = vmatpush1.bf16.msra.mxu0 0
  %1089 = vmatprep.subr.bf16.mxu0 0
  %1090 = vmatpush1.bf16.msra.mxu0 0
  %1091 = vmatprep.subr.bf16.mxu0 0
  %1092 = vmatpush1.bf16.msra.mxu0 0
  %1093 = vmatprep.subr.bf16.mxu0 0
  %1094 = vmatpush1.bf16.msra.mxu0 0
  %1095 = vmatprep.subr.bf16.mxu0 0
  %1096 = vmatpush1.bf16.msra.mxu0 0
  %1097 = vmatprep.subr.bf16.mxu0 0
  %1098 = vmatpush1.bf16.msra.mxu0 0
  %1099 = vmatprep.mubr.bf16.mxu0 0
  %1100 = vmatmul.mubr.bf16.gmra.mrb[0].mxu0 %v1065
  %v1101 = vpop.f32.mrb[0].mxu0
  %v1102 = vadd.f32 0.0, %v1101
  %v1103 = vpop.f32.mrb[0].mxu0
  %v1104 = vpop.f32.mrb[0].mxu0
  %v1105 = vpop.f32.mrb[0].mxu0
  %1106 = vdwg.mxu0
  %v1108 = vrot.slane %v1102, 4
  %v1110 = vadd.f32 %v225, %v1108
  %v1111 = vmul.f32 %v1110, 0.5
  %v1112 = vtanh.pop %v1111
  %v1113 = vadd.f32 %v1112, 1.0
  %v1114 = vmul.f32 %v1113, 0.5
  %v1116 = vrot.slane %v983, 6
  %v1118 = vmul.f32 %v1114, %v1116
  %1120 = vrot.lane.b32.xlu0 %v1112, 64
  %v1121 = vpop.permute.xlu0 %1120
  %v1123 = vmul.f32 %v1114, %v1121
  %1125 = vrot.lane.b32.xlu0 %v1123, 32
  %v1126 = vpop.permute.xlu0 %1125
  %v1128 = vadd.f32 %v1118, %v1126
  %v1129 = vtanh.pop %v1128
  %1131 = vrot.lane.b32.xlu0 %v1129, 64
  %v1132 = vpop.permute.xlu0 %1131
  %v1134 = vmul.f32 %v1114, %v1132
  %v1135 = vpack.c.bf16 %v1134, %v1134
  %1136 = vrot.lane.b32.xlu0 %v990, 32
  %v1137 = vpop.permute.xlu0 %1136
  %v1139 = vrot.slane %v1059, 7
  %1140 = vrot.lane.b32.xlu0 %v1139, 64
  %v1141 = vpop.permute.xlu0 %1140
  %v1144 = vsel %vm143, %v1137, %v1141
  %v1146 = vrot.slane %v1144, 1
  %v1148 = vsel %vm398, %v1146, 0
  %1150 = vmatprep.subr.bf16.mxu0 0
  %1151 = vmatpush1.bf16.msra.mxu0 %v247
  %1152 = vmatprep.subr.bf16.mxu0 0
  %1153 = vmatpush1.bf16.msra.mxu0 %v248
  %1154 = vmatprep.subr.bf16.mxu0 0
  %1155 = vmatpush1.bf16.msra.mxu0 %v249
  %1156 = vmatprep.subr.bf16.mxu0 0
  %1157 = vmatpush1.bf16.msra.mxu0 %v250
  %1158 = vmatprep.subr.bf16.mxu0 0
  %1159 = vmatpush1.bf16.msra.mxu0 0
  %1160 = vmatprep.subr.bf16.mxu0 0
  %1161 = vmatpush1.bf16.msra.mxu0 0
  %1162 = vmatprep.subr.bf16.mxu0 0
  %1163 = vmatpush1.bf16.msra.mxu0 0
  %1164 = vmatprep.subr.bf16.mxu0 0
  %1165 = vmatpush1.bf16.msra.mxu0 0
  %1166 = vmatprep.subr.bf16.mxu0 0
  %1167 = vmatpush1.bf16.msra.mxu0 0
  %1168 = vmatprep.subr.bf16.mxu0 0
  %1169 = vmatpush1.bf16.msra.mxu0 0
  %1170 = vmatprep.subr.bf16.mxu0 0
  %1171 = vmatpush1.bf16.msra.mxu0 0
  %1172 = vmatprep.subr.bf16.mxu0 0
  %1173 = vmatpush1.bf16.msra.mxu0 0
  %1174 = vmatprep.subr.bf16.mxu0 0
  %1175 = vmatpush1.bf16.msra.mxu0 0
  %1176 = vmatprep.subr.bf16.mxu0 0
  %1177 = vmatpush1.bf16.msra.mxu0 0
  %1178 = vmatprep.subr.bf16.mxu0 0
  %1179 = vmatpush1.bf16.msra.mxu0 0
  %1180 = vmatprep.subr.bf16.mxu0 0
  %1181 = vmatpush1.bf16.msra.mxu0 0
  %1182 = vmatprep.mubr.bf16.mxu0 0
  %1183 = vmatmul.mubr.bf16.gmra.mrb[0].mxu0 %v1148
  %v1184 = vpop.f32.mrb[0].mxu0
  %v1185 = vadd.f32 %v397, %v1184
  %v1186 = vpop.f32.mrb[0].mxu0
  %v1187 = vpop.f32.mrb[0].mxu0
  %v1188 = vpop.f32.mrb[0].mxu0
  %1189 = vdwg.mxu0
  %v1190 = vmul.f32 %v1185, 0.5
  %v1191 = vtanh.pop %v1190
  %v1192 = vadd.f32 %v1191, 1.0
  %v1193 = vmul.f32 %v1192, 0.5
  %v1194 = vmul.f32 %v1193, %v1052
  %1196 = vrot.lane.b32.xlu0 %v1191, 64
  %v1197 = vpop.permute.xlu0 %1196
  %v1199 = vmul.f32 %v1193, %v1197
  %1201 = vrot.lane.b32.xlu0 %v1199, 32
  %v1202 = vpop.permute.xlu0 %1201
  %v1204 = vadd.f32 %v1194, %v1202
  %v1205 = vtanh.pop %v1204
  %1207 = vrot.lane.b32.xlu0 %v1205, 64
  %v1208 = vpop.permute.xlu0 %1207
  %v1210 = vmul.f32 %v1193, %v1208
  %v1211 = vpack.c.bf16 %v1210, %v1210
  %v1213 = vrot.slane %v1135, 2
  %1214 = vrot.lane.b32.xlu0 %v1213, 32
  %v1215 = vpop.permute.xlu0 %1214
  %v1217 = vsel %vm143, %v1215, 0
  %1219 = vmatprep.subr.bf16.mxu0 0
  %1220 = vmatpush1.bf16.msra.mxu0 %v237
  %1221 = vmatprep.subr.bf16.mxu0 0
  %1222 = vmatpush1.bf16.msra.mxu0 %v238
  %1223 = vmatprep.subr.bf16.mxu0 0
  %1224 = vmatpush1.bf16.msra.mxu0 0
  %1225 = vmatprep.subr.bf16.mxu0 0
  %1226 = vmatpush1.bf16.msra.mxu0 0
  %1227 = vmatprep.subr.bf16.mxu0 0
  %1228 = vmatpush1.bf16.msra.mxu0 0
  %1229 = vmatprep.subr.bf16.mxu0 0
  %1230 = vmatpush1.bf16.msra.mxu0 0
  %1231 = vmatprep.subr.bf16.mxu0 0
  %1232 = vmatpush1.bf16.msra.mxu0 0
  %1233 = vmatprep.subr.bf16.mxu0 0
  %1234 = vmatpush1.bf16.msra.mxu0 0
  %1235 = vmatprep.subr.bf16.mxu0 0
  %1236 = vmatpush1.bf16.msra.mxu0 0
  %1237 = vmatprep.subr.bf16.mxu0 0
  %1238 = vmatpush1.bf16.msra.mxu0 0
  %1239 = vmatprep.subr.bf16.mxu0 0
  %1240 = vmatpush1.bf16.msra.mxu0 0
  %1241 = vmatprep.subr.bf16.mxu0 0
  %1242 = vmatpush1.bf16.msra.mxu0 0
  %1243 = vmatprep.subr.bf16.mxu0 0
  %1244 = vmatpush1.bf16.msra.mxu0 0
  %1245 = vmatprep.subr.bf16.mxu0 0
  %1246 = vmatpush1.bf16.msra.mxu0 0
  %1247 = vmatprep.subr.bf16.mxu0 0
  %1248 = vmatpush1.bf16.msra.mxu0 0
  %1249 = vmatprep.subr.bf16.mxu0 0
  %1250 = vmatpush1.bf16.msra.mxu0 0
  %1251 = vmatprep.mubr.bf16.mxu0 0
  %1252 = vmatmul.mubr.bf16.gmra.mrb[0].mxu0 %v1217
  %v1253 = vpop.f32.mrb[0].mxu0
  %v1254 = vadd.f32 0.0, %v1253
  %v1255 = vpop.f32.mrb[0].mxu0
  %v1256 = vpop.f32.mrb[0].mxu0
  %v1257 = vpop.f32.mrb[0].mxu0
  %1258 = vdwg.mxu0
  %v1260 = vrot.slane %v1254, 2
  %v1262 = vadd.f32 %v225, %v1260
  %v1263 = vmul.f32 %v1262, 0.5
  %v1264 = vtanh.pop %v1263
  %v1265 = vadd.f32 %v1264, 1.0
  %v1266 = vmul.f32 %v1265, 0.5
  %v1268 = vrot.slane %v1128, 6
  %v1270 = vmul.f32 %v1266, %v1268
  %1272 = vrot.lane.b32.xlu0 %v1264, 64
  %v1273 = vpop.permute.xlu0 %1272
  %v1275 = vmul.f32 %v1266, %v1273
  %1277 = vrot.lane.b32.xlu0 %v1275, 32
  %v1278 = vpop.permute.xlu0 %1277
  %v1280 = vadd.f32 %v1270, %v1278
  %v1281 = vtanh.pop %v1280
  %1283 = vrot.lane.b32.xlu0 %v1281, 64
  %v1284 = vpop.permute.xlu0 %1283
  %v1286 = vmul.f32 %v1266, %v1284
  %v1287 = vpack.c.bf16 %v1286, %v1286
  %1288 = vrot.lane.b32.xlu0 %v1135, 32
  %v1289 = vpop.permute.xlu0 %1288
  %v1291 = vrot.slane %v1211, 6
  %1292 = vrot.lane.b32.xlu0 %v1291, 64
  %v1293 = vpop.permute.xlu0 %1292
  %v1296 = vsel %vm143, %v1289, %v1293
  %v1298 = vrot.slane %v1296, 2
  %v1300 = vsel %vm398, %v1298, 0
  %1302 = vmatprep.subr.bf16.mxu0 0
  %1303 = vmatpush1.bf16.msra.mxu0 %v247
  %1304 = vmatprep.subr.bf16.mxu0 0
  %1305 = vmatpush1.bf16.msra.mxu0 %v248
  %1306 = vmatprep.subr.bf16.mxu0 0
  %1307 = vmatpush1.bf16.msra.mxu0 %v249
  %1308 = vmatprep.subr.bf16.mxu0 0
  %1309 = vmatpush1.bf16.msra.mxu0 %v250
  %1310 = vmatprep.subr.bf16.mxu0 0
  %1311 = vmatpush1.bf16.msra.mxu0 0
  %1312 = vmatprep.subr.bf16.mxu0 0
  %1313 = vmatpush1.bf16.msra.mxu0 0
  %1314 = vmatprep.subr.bf16.mxu0 0
  %1315 = vmatpush1.bf16.msra.mxu0 0
  %1316 = vmatprep.subr.bf16.mxu0 0
  %1317 = vmatpush1.bf16.msra.mxu0 0
  %1318 = vmatprep.subr.bf16.mxu0 0
  %1319 = vmatpush1.bf16.msra.mxu0 0
  %1320 = vmatprep.subr.bf16.mxu0 0
  %1321 = vmatpush1.bf16.msra.mxu0 0
  %1322 = vmatprep.subr.bf16.mxu0 0
  %1323 = vmatpush1.bf16.msra.mxu0 0
  %1324 = vmatprep.subr.bf16.mxu0 0
  %1325 = vmatpush1.bf16.msra.mxu0 0
  %1326 = vmatprep.subr.bf16.mxu0 0
  %1327 = vmatpush1.bf16.msra.mxu0 0
  %1328 = vmatprep.subr.bf16.mxu0 0
  %1329 = vmatpush1.bf16.msra.mxu0 0
  %1330 = vmatprep.subr.bf16.mxu0 0
  %1331 = vmatpush1.bf16.msra.mxu0 0
  %1332 = vmatprep.subr.bf16.mxu0 0
  %1333 = vmatpush1.bf16.msra.mxu0 0
  %1334 = vmatprep.mubr.bf16.mxu0 0
  %1335 = vmatmul.mubr.bf16.gmra.mrb[0].mxu0 %v1300
  %v1336 = vpop.f32.mrb[0].mxu0
  %v1337 = vadd.f32 %v397, %v1336
  %v1338 = vpop.f32.mrb[0].mxu0
  %v1339 = vpop.f32.mrb[0].mxu0
  %v1340 = vpop.f32.mrb[0].mxu0
  %1341 = vdwg.mxu0
  %v1342 = vmul.f32 %v1337, 0.5
  %v1343 = vtanh.pop %v1342
  %v1344 = vadd.f32 %v1343, 1.0
  %v1345 = vmul.f32 %v1344, 0.5
  %v1346 = vmul.f32 %v1345, %v1204
  %1348 = vrot.lane.b32.xlu0 %v1343, 64
  %v1349 = vpop.permute.xlu0 %1348
  %v1351 = vmul.f32 %v1345, %v1349
  %1353 = vrot.lane.b32.xlu0 %v1351, 32
  %v1354 = vpop.permute.xlu0 %1353
  %v1356 = vadd.f32 %v1346, %v1354
  %v1357 = vtanh.pop %v1356
  %1359 = vrot.lane.b32.xlu0 %v1357, 64
  %v1360 = vpop.permute.xlu0 %1359
  %v1362 = vmul.f32 %v1345, %v1360
  %v1363 = vpack.c.bf16 %v1362, %v1362
  %v1365 = vrot.slane %v1287, 3
  %1366 = vrot.lane.b32.xlu0 %v1365, 32
  %v1367 = vpop.permute.xlu0 %1366
  %v1369 = vsel %vm143, %v1367, 0
  %1371 = vmatprep.subr.bf16.mxu0 0
  %1372 = vmatpush1.bf16.msra.mxu0 %v237
  %1373 = vmatprep.subr.bf16.mxu0 0
  %1374 = vmatpush1.bf16.msra.mxu0 %v238
  %1375 = vmatprep.subr.bf16.mxu0 0
  %1376 = vmatpush1.bf16.msra.mxu0 0
  %1377 = vmatprep.subr.bf16.mxu0 0
  %1378 = vmatpush1.bf16.msra.mxu0 0
  %1379 = vmatprep.subr.bf16.mxu0 0
  %1380 = vmatpush1.bf16.msra.mxu0 0
  %1381 = vmatprep.subr.bf16.mxu0 0
  %1382 = vmatpush1.bf16.msra.mxu0 0
  %1383 = vmatprep.subr.bf16.mxu0 0
  %1384 = vmatpush1.bf16.msra.mxu0 0
  %1385 = vmatprep.subr.bf16.mxu0 0
  %1386 = vmatpush1.bf16.msra.mxu0 0
  %1387 = vmatprep.subr.bf16.mxu0 0
  %1388 = vmatpush1.bf16.msra.mxu0 0
  %1389 = vmatprep.subr.bf16.mxu0 0
  %1390 = vmatpush1.bf16.msra.mxu0 0
  %1391 = vmatprep.subr.bf16.mxu0 0
  %1392 = vmatpush1.bf16.msra.mxu0 0
  %1393 = vmatprep.subr.bf16.mxu0 0
  %1394 = vmatpush1.bf16.msra.mxu0 0
  %1395 = vmatprep.subr.bf16.mxu0 0
  %1396 = vmatpush1.bf16.msra.mxu0 0
  %1397 = vmatprep.subr.bf16.mxu0 0
  %1398 = vmatpush1.bf16.msra.mxu0 0
  %1399 = vmatprep.subr.bf16.mxu0 0
  %1400 = vmatpush1.bf16.msra.mxu0 0
  %1401 = vmatprep.subr.bf16.mxu0 0
  %1402 = vmatpush1.bf16.msra.mxu0 0
  %1403 = vmatprep.mubr.bf16.mxu0 0
  %1404 = vmatmul.mubr.bf16.gmra.mrb[0].mxu0 %v1369
  %v1405 = vpop.f32.mrb[0].mxu0
  %v1406 = vadd.f32 0.0, %v1405
  %v1407 = vpop.f32.mrb[0].mxu0
  %v1408 = vpop.f32.mrb[0].mxu0
  %v1409 = vpop.f32.mrb[0].mxu0
  %1410 = vdwg.mxu0
  %v1411 = vadd.f32 %v230, %v1406
  %v1412 = vmul.f32 %v1411, 0.5
  %v1413 = vtanh.pop %v1412
  %v1414 = vadd.f32 %v1413, 1.0
  %v1415 = vmul.f32 %v1414, 0.5
  %v1417 = vrot.slane %v1280, 6
  %v1419 = vmul.f32 %v1415, %v1417
  %1421 = vrot.lane.b32.xlu0 %v1413, 64
  %v1422 = vpop.permute.xlu0 %1421
  %v1424 = vmul.f32 %v1415, %v1422
  %1426 = vrot.lane.b32.xlu0 %v1424, 32
  %v1427 = vpop.permute.xlu0 %1426
  %v1429 = vadd.f32 %v1419, %v1427
  %v1430 = vtanh.pop %v1429
  %1432 = vrot.lane.b32.xlu0 %v1430, 64
  %v1433 = vpop.permute.xlu0 %1432
  %v1435 = vmul.f32 %v1415, %v1433
  %v1436 = vpack.c.bf16 %v1435, %v1435
  %1437 = vrot.lane.b32.xlu0 %v1287, 32
  %v1438 = vpop.permute.xlu0 %1437
  %v1440 = vrot.slane %v1363, 5
  %1441 = vrot.lane.b32.xlu0 %v1440, 64
  %v1442 = vpop.permute.xlu0 %1441
  %v1445 = vsel %vm143, %v1438, %v1442
  %v1447 = vrot.slane %v1445, 3
  %v1449 = vsel %vm398, %v1447, 0
  %1451 = vmatprep.subr.bf16.mxu0 0
  %1452 = vmatpush1.bf16.msra.mxu0 %v247
  %1453 = vmatprep.subr.bf16.mxu0 0
  %1454 = vmatpush1.bf16.msra.mxu0 %v248
  %1455 = vmatprep.subr.bf16.mxu0 0
  %1456 = vmatpush1.bf16.msra.mxu0 %v249
  %1457 = vmatprep.subr.bf16.mxu0 0
  %1458 = vmatpush1.bf16.msra.mxu0 %v250
  %1459 = vmatprep.subr.bf16.mxu0 0
  %1460 = vmatpush1.bf16.msra.mxu0 0
  %1461 = vmatprep.subr.bf16.mxu0 0
  %1462 = vmatpush1.bf16.msra.mxu0 0
  %1463 = vmatprep.subr.bf16.mxu0 0
  %1464 = vmatpush1.bf16.msra.mxu0 0
  %1465 = vmatprep.subr.bf16.mxu0 0
  %1466 = vmatpush1.bf16.msra.mxu0 0
  %1467 = vmatprep.subr.bf16.mxu0 0
  %1468 = vmatpush1.bf16.msra.mxu0 0
  %1469 = vmatprep.subr.bf16.mxu0 0
  %1470 = vmatpush1.bf16.msra.mxu0 0
  %1471 = vmatprep.subr.bf16.mxu0 0
  %1472 = vmatpush1.bf16.msra.mxu0 0
  %1473 = vmatprep.subr.bf16.mxu0 0
  %1474 = vmatpush1.bf16.msra.mxu0 0
  %1475 = vmatprep.subr.bf16.mxu0 0
  %1476 = vmatpush1.bf16.msra.mxu0 0
  %1477 = vmatprep.subr.bf16.mxu0 0
  %1478 = vmatpush1.bf16.msra.mxu0 0
  %1479 = vmatprep.subr.bf16.mxu0 0
  %1480 = vmatpush1.bf16.msra.mxu0 0
  %1481 = vmatprep.subr.bf16.mxu0 0
  %1482 = vmatpush1.bf16.msra.mxu0 0
  %1483 = vmatprep.mubr.bf16.mxu0 0
  %1484 = vmatmul.mubr.bf16.gmra.mrb[0].mxu0 %v1449
  %v1485 = vpop.f32.mrb[0].mxu0
  %v1486 = vadd.f32 %v397, %v1485
  %v1487 = vpop.f32.mrb[0].mxu0
  %v1488 = vpop.f32.mrb[0].mxu0
  %v1489 = vpop.f32.mrb[0].mxu0
  %1490 = vdwg.mxu0
  %v1491 = vmul.f32 %v1486, 0.5
  %v1492 = vtanh.pop %v1491
  %v1493 = vadd.f32 %v1492, 1.0
  %v1494 = vmul.f32 %v1493, 0.5
  %v1495 = vmul.f32 %v1494, %v1356
  %1497 = vrot.lane.b32.xlu0 %v1492, 64
  %v1498 = vpop.permute.xlu0 %1497
  %v1500 = vmul.f32 %v1494, %v1498
  %1502 = vrot.lane.b32.xlu0 %v1500, 32
  %v1503 = vpop.permute.xlu0 %1502
  %v1505 = vadd.f32 %v1495, %v1503
  %v1506 = vtanh.pop %v1505
  %1508 = vrot.lane.b32.xlu0 %v1506, 64
  %v1509 = vpop.permute.xlu0 %1508
  %v1511 = vmul.f32 %v1494, %v1509
  %v1512 = vpack.c.bf16 %v1511, %v1511
  %1514 = vrot.lane.b32.xlu0 %v1436, 32
  %v1515 = vpop.permute.xlu0 %1514
  %v1517 = vsel %vm143, %v1515, 0
  %1519 = vmatprep.subr.bf16.mxu0 0
  %1520 = vmatpush1.bf16.msra.mxu0 %v237
  %1521 = vmatprep.subr.bf16.mxu0 0
  %1522 = vmatpush1.bf16.msra.mxu0 %v238
  %1523 = vmatprep.subr.bf16.mxu0 0
  %1524 = vmatpush1.bf16.msra.mxu0 0
  %1525 = vmatprep.subr.bf16.mxu0 0
  %1526 = vmatpush1.bf16.msra.mxu0 0
  %1527 = vmatprep.subr.bf16.mxu0 0
  %1528 = vmatpush1.bf16.msra.mxu0 0
  %1529 = vmatprep.subr.bf16.mxu0 0
  %1530 = vmatpush1.bf16.msra.mxu0 0
  %1531 = vmatprep.subr.bf16.mxu0 0
  %1532 = vmatpush1.bf16.msra.mxu0 0
  %1533 = vmatprep.subr.bf16.mxu0 0
  %1534 = vmatpush1.bf16.msra.mxu0 0
  %1535 = vmatprep.subr.bf16.mxu0 0
  %1536 = vmatpush1.bf16.msra.mxu0 0
  %1537 = vmatprep.subr.bf16.mxu0 0
  %1538 = vmatpush1.bf16.msra.mxu0 0
  %1539 = vmatprep.subr.bf16.mxu0 0
  %1540 = vmatpush1.bf16.msra.mxu0 0
  %1541 = vmatprep.subr.bf16.mxu0 0
  %1542 = vmatpush1.bf16.msra.mxu0 0
  %1543 = vmatprep.subr.bf16.mxu0 0
  %1544 = vmatpush1.bf16.msra.mxu0 0
  %1545 = vmatprep.subr.bf16.mxu0 0
  %1546 = vmatpush1.bf16.msra.mxu0 0
  %1547 = vmatprep.subr.bf16.mxu0 0
  %1548 = vmatpush1.bf16.msra.mxu0 0
  %1549 = vmatprep.subr.bf16.mxu0 0
  %1550 = vmatpush1.bf16.msra.mxu0 0
  %1551 = vmatprep.mubr.bf16.mxu0 0
  %1552 = vmatmul.mubr.bf16.gmra.mrb[0].mxu0 %v1517
  %v1553 = vpop.f32.mrb[0].mxu0
  %v1554 = vadd.f32 0.0, %v1553
  %v1555 = vpop.f32.mrb[0].mxu0
  %v1556 = vpop.f32.mrb[0].mxu0
  %v1557 = vpop.f32.mrb[0].mxu0
  %1558 = vdwg.mxu0
  %v1560 = vrot.slane %v1554, 6
  %v1562 = vadd.f32 %v230, %v1560
  %v1563 = vmul.f32 %v1562, 0.5
  %v1564 = vtanh.pop %v1563
  %v1565 = vadd.f32 %v1564, 1.0
  %v1566 = vmul.f32 %v1565, 0.5
  %v1568 = vrot.slane %v1429, 6
  %v1570 = vmul.f32 %v1566, %v1568
  %1572 = vrot.lane.b32.xlu0 %v1564, 64
  %v1573 = vpop.permute.xlu0 %1572
  %v1575 = vmul.f32 %v1566, %v1573
  %1577 = vrot.lane.b32.xlu0 %v1575, 32
  %v1578 = vpop.permute.xlu0 %1577
  %v1580 = vadd.f32 %v1570, %v1578
  %v1581 = vtanh.pop %v1580
  %1583 = vrot.lane.b32.xlu0 %v1581, 64
  %v1584 = vpop.permute.xlu0 %1583
  %v1586 = vmul.f32 %v1566, %v1584
  %v1587 = vpack.c.bf16 %v1586, %v1586
  %1589 = vrot.lane.b32.xlu0 %v1512, 64
  %v1590 = vpop.permute.xlu0 %1589
  %v1592 = vsel %vm143, %v1515, %v1590
  %v1593 = vsel %vm398, %v1592, 0
  %1595 = vmatprep.subr.bf16.mxu0 0
  %1596 = vmatpush1.bf16.msra.mxu0 %v247
  %1597 = vmatprep.subr.bf16.mxu0 0
  %1598 = vmatpush1.bf16.msra.mxu0 %v248
  %1599 = vmatprep.subr.bf16.mxu0 0
  %1600 = vmatpush1.bf16.msra.mxu0 %v249
  %1601 = vmatprep.subr.bf16.mxu0 0
  %1602 = vmatpush1.bf16.msra.mxu0 %v250
  %1603 = vmatprep.subr.bf16.mxu0 0
  %1604 = vmatpush1.bf16.msra.mxu0 0
  %1605 = vmatprep.subr.bf16.mxu0 0
  %1606 = vmatpush1.bf16.msra.mxu0 0
  %1607 = vmatprep.subr.bf16.mxu0 0
  %1608 = vmatpush1.bf16.msra.mxu0 0
  %1609 = vmatprep.subr.bf16.mxu0 0
  %1610 = vmatpush1.bf16.msra.mxu0 0
  %1611 = vmatprep.subr.bf16.mxu0 0
  %1612 = vmatpush1.bf16.msra.mxu0 0
  %1613 = vmatprep.subr.bf16.mxu0 0
  %1614 = vmatpush1.bf16.msra.mxu0 0
  %1615 = vmatprep.subr.bf16.mxu0 0
  %1616 = vmatpush1.bf16.msra.mxu0 0
  %1617 = vmatprep.subr.bf16.mxu0 0
  %1618 = vmatpush1.bf16.msra.mxu0 0
  %1619 = vmatprep.subr.bf16.mxu0 0
  %1620 = vmatpush1.bf16.msra.mxu0 0
  %1621 = vmatprep.subr.bf16.mxu0 0
  %1622 = vmatpush1.bf16.msra.mxu0 0
  %1623 = vmatprep.subr.bf16.mxu0 0
  %1624 = vmatpush1.bf16.msra.mxu0 0
  %1625 = vmatprep.subr.bf16.mxu0 0
  %1626 = vmatpush1.bf16.msra.mxu0 0
  %1627 = vmatprep.mubr.bf16.mxu0 0
  %1628 = vmatmul.mubr.bf16.gmra.mrb[0].mxu0 %v1593
  %v1629 = vpop.f32.mrb[0].mxu0
  %v1630 = vadd.f32 %v397, %v1629
  %v1631 = vpop.f32.mrb[0].mxu0
  %v1632 = vpop.f32.mrb[0].mxu0
  %v1633 = vpop.f32.mrb[0].mxu0
  %1634 = vdwg.mxu0
  %v1635 = vmul.f32 %v1630, 0.5
  %v1636 = vtanh.pop %v1635
  %v1637 = vadd.f32 %v1636, 1.0
  %v1638 = vmul.f32 %v1637, 0.5
  %v1639 = vmul.f32 %v1638, %v1505
  %1641 = vrot.lane.b32.xlu0 %v1636, 64
  %v1642 = vpop.permute.xlu0 %1641
  %v1644 = vmul.f32 %v1638, %v1642
  %1646 = vrot.lane.b32.xlu0 %v1644, 32
  %v1647 = vpop.permute.xlu0 %1646
  %v1649 = vadd.f32 %v1639, %v1647
  %v1650 = vtanh.pop %v1649
  %1652 = vrot.lane.b32.xlu0 %v1650, 64
  %v1653 = vpop.permute.xlu0 %1652
  %v1655 = vmul.f32 %v1638, %v1653
  %v1656 = vpack.c.bf16 %v1655, %v1655
  %v1658 = vrot.slane %v1587, 1
  %1659 = vrot.lane.b32.xlu0 %v1658, 32
  %v1660 = vpop.permute.xlu0 %1659
  %v1662 = vsel %vm143, %v1660, 0
  %1664 = vmatprep.subr.bf16.mxu0 0
  %1665 = vmatpush1.bf16.msra.mxu0 %v237
  %1666 = vmatprep.subr.bf16.mxu0 0
  %1667 = vmatpush1.bf16.msra.mxu0 %v238
  %1668 = vmatprep.subr.bf16.mxu0 0
  %1669 = vmatpush1.bf16.msra.mxu0 0
  %1670 = vmatprep.subr.bf16.mxu0 0
  %1671 = vmatpush1.bf16.msra.mxu0 0
  %1672 = vmatprep.subr.bf16.mxu0 0
  %1673 = vmatpush1.bf16.msra.mxu0 0
  %1674 = vmatprep.subr.bf16.mxu0 0
  %1675 = vmatpush1.bf16.msra.mxu0 0
  %1676 = vmatprep.subr.bf16.mxu0 0
  %1677 = vmatpush1.bf16.msra.mxu0 0
  %1678 = vmatprep.subr.bf16.mxu0 0
  %1679 = vmatpush1.bf16.msra.mxu0 0
  %1680 = vmatprep.subr.bf16.mxu0 0
  %1681 = vmatpush1.bf16.msra.mxu0 0
  %1682 = vmatprep.subr.bf16.mxu0 0
  %1683 = vmatpush1.bf16.msra.mxu0 0
  %1684 = vmatprep.subr.bf16.mxu0 0
  %1685 = vmatpush1.bf16.msra.mxu0 0
  %1686 = vmatprep.subr.bf16.mxu0 0
  %1687 = vmatpush1.bf16.msra.mxu0 0
  %1688 = vmatprep.subr.bf16.mxu0 0
  %1689 = vmatpush1.bf16.msra.mxu0 0
  %1690 = vmatprep.subr.bf16.mxu0 0
  %1691 = vmatpush1.bf16.msra.mxu0 0
  %1692 = vmatprep.subr.bf16.mxu0 0
  %1693 = vmatpush1.bf16.msra.mxu0 0
  %1694 = vmatprep.subr.bf16.mxu0 0
  %1695 = vmatpush1.bf16.msra.mxu0 0
  %1696 = vmatprep.mubr.bf16.mxu0 0
  %1697 = vmatmul.mubr.bf16.gmra.mrb[0].mxu0 %v1662
  %v1698 = vpop.f32.mrb[0].mxu0
  %v1699 = vadd.f32 0.0, %v1698
  %v1700 = vpop.f32.mrb[0].mxu0
  %v1701 = vpop.f32.mrb[0].mxu0
  %v1702 = vpop.f32.mrb[0].mxu0
  %1703 = vdwg.mxu0
  %v1705 = vrot.slane %v1699, 4
  %v1707 = vadd.f32 %v230, %v1705
  %v1708 = vmul.f32 %v1707, 0.5
  %v1709 = vtanh.pop %v1708
  %v1710 = vadd.f32 %v1709, 1.0
  %v1711 = vmul.f32 %v1710, 0.5
  %v1713 = vrot.slane %v1580, 6
  %v1715 = vmul.f32 %v1711, %v1713
  %1717 = vrot.lane.b32.xlu0 %v1709, 64
  %v1718 = vpop.permute.xlu0 %1717
  %v1720 = vmul.f32 %v1711, %v1718
  %1722 = vrot.lane.b32.xlu0 %v1720, 32
  %v1723 = vpop.permute.xlu0 %1722
  %v1725 = vadd.f32 %v1715, %v1723
  %v1726 = vtanh.pop %v1725
  %1728 = vrot.lane.b32.xlu0 %v1726, 64
  %v1729 = vpop.permute.xlu0 %1728
  %v1731 = vmul.f32 %v1711, %v1729
  %v1732 = vpack.c.bf16 %v1731, %v1731
  %1733 = vrot.lane.b32.xlu0 %v1587, 32
  %v1734 = vpop.permute.xlu0 %1733
  %v1736 = vrot.slane %v1656, 7
  %1737 = vrot.lane.b32.xlu0 %v1736, 64
  %v1738 = vpop.permute.xlu0 %1737
  %v1741 = vsel %vm143, %v1734, %v1738
  %v1743 = vrot.slane %v1741, 1
  %v1745 = vsel %vm398, %v1743, 0
  %1747 = vmatprep.subr.bf16.mxu0 0
  %1748 = vmatpush1.bf16.msra.mxu0 %v247
  %1749 = vmatprep.subr.bf16.mxu0 0
  %1750 = vmatpush1.bf16.msra.mxu0 %v248
  %1751 = vmatprep.subr.bf16.mxu0 0
  %1752 = vmatpush1.bf16.msra.mxu0 %v249
  %1753 = vmatprep.subr.bf16.mxu0 0
  %1754 = vmatpush1.bf16.msra.mxu0 %v250
  %1755 = vmatprep.subr.bf16.mxu0 0
  %1756 = vmatpush1.bf16.msra.mxu0 0
  %1757 = vmatprep.subr.bf16.mxu0 0
  %1758 = vmatpush1.bf16.msra.mxu0 0
  %1759 = vmatprep.subr.bf16.mxu0 0
  %1760 = vmatpush1.bf16.msra.mxu0 0
  %1761 = vmatprep.subr.bf16.mxu0 0
  %1762 = vmatpush1.bf16.msra.mxu0 0
  %1763 = vmatprep.subr.bf16.mxu0 0
  %1764 = vmatpush1.bf16.msra.mxu0 0
  %1765 = vmatprep.subr.bf16.mxu0 0
  %1766 = vmatpush1.bf16.msra.mxu0 0
  %1767 = vmatprep.subr.bf16.mxu0 0
  %1768 = vmatpush1.bf16.msra.mxu0 0
  %1769 = vmatprep.subr.bf16.mxu0 0
  %1770 = vmatpush1.bf16.msra.mxu0 0
  %1771 = vmatprep.subr.bf16.mxu0 0
  %1772 = vmatpush1.bf16.msra.mxu0 0
  %1773 = vmatprep.subr.bf16.mxu0 0
  %1774 = vmatpush1.bf16.msra.mxu0 0
  %1775 = vmatprep.subr.bf16.mxu0 0
  %1776 = vmatpush1.bf16.msra.mxu0 0
  %1777 = vmatprep.subr.bf16.mxu0 0
  %1778 = vmatpush1.bf16.msra.mxu0 0
  %1779 = vmatprep.mubr.bf16.mxu0 0
  %1780 = vmatmul.mubr.bf16.gmra.mrb[0].mxu0 %v1745
  %v1781 = vpop.f32.mrb[0].mxu0
  %v1782 = vadd.f32 %v397, %v1781
  %v1783 = vpop.f32.mrb[0].mxu0
  %v1784 = vpop.f32.mrb[0].mxu0
  %v1785 = vpop.f32.mrb[0].mxu0
  %1786 = vdwg.mxu0
  %v1787 = vmul.f32 %v1782, 0.5
  %v1788 = vtanh.pop %v1787
  %v1789 = vadd.f32 %v1788, 1.0
  %v1790 = vmul.f32 %v1789, 0.5
  %v1791 = vmul.f32 %v1790, %v1649
  %1793 = vrot.lane.b32.xlu0 %v1788, 64
  %v1794 = vpop.permute.xlu0 %1793
  %v1796 = vmul.f32 %v1790, %v1794
  %1798 = vrot.lane.b32.xlu0 %v1796, 32
  %v1799 = vpop.permute.xlu0 %1798
  %v1801 = vadd.f32 %v1791, %v1799
  %v1802 = vtanh.pop %v1801
  %1804 = vrot.lane.b32.xlu0 %v1802, 64
  %v1805 = vpop.permute.xlu0 %1804
  %v1807 = vmul.f32 %v1790, %v1805
  %v1808 = vpack.c.bf16 %v1807, %v1807
  %v1810 = vrot.slane %v1732, 2
  %1811 = vrot.lane.b32.xlu0 %v1810, 32
  %v1812 = vpop.permute.xlu0 %1811
  %v1814 = vsel %vm143, %v1812, 0
  %1816 = vmatprep.subr.bf16.mxu0 0
  %1817 = vmatpush1.bf16.msra.mxu0 %v237
  %1818 = vmatprep.subr.bf16.mxu0 0
  %1819 = vmatpush1.bf16.msra.mxu0 %v238
  %1820 = vmatprep.subr.bf16.mxu0 0
  %1821 = vmatpush1.bf16.msra.mxu0 0
  %1822 = vmatprep.subr.bf16.mxu0 0
  %1823 = vmatpush1.bf16.msra.mxu0 0
  %1824 = vmatprep.subr.bf16.mxu0 0
  %1825 = vmatpush1.bf16.msra.mxu0 0
  %1826 = vmatprep.subr.bf16.mxu0 0
  %1827 = vmatpush1.bf16.msra.mxu0 0
  %1828 = vmatprep.subr.bf16.mxu0 0
  %1829 = vmatpush1.bf16.msra.mxu0 0
  %1830 = vmatprep.subr.bf16.mxu0 0
  %1831 = vmatpush1.bf16.msra.mxu0 0
  %1832 = vmatprep.subr.bf16.mxu0 0
  %1833 = vmatpush1.bf16.msra.mxu0 0
  %1834 = vmatprep.subr.bf16.mxu0 0
  %1835 = vmatpush1.bf16.msra.mxu0 0
  %1836 = vmatprep.subr.bf16.mxu0 0
  %1837 = vmatpush1.bf16.msra.mxu0 0
  %1838 = vmatprep.subr.bf16.mxu0 0
  %1839 = vmatpush1.bf16.msra.mxu0 0
  %1840 = vmatprep.subr.bf16.mxu0 0
  %1841 = vmatpush1.bf16.msra.mxu0 0
  %1842 = vmatprep.subr.bf16.mxu0 0
  %1843 = vmatpush1.bf16.msra.mxu0 0
  %1844 = vmatprep.subr.bf16.mxu0 0
  %1845 = vmatpush1.bf16.msra.mxu0 0
  %1846 = vmatprep.subr.bf16.mxu0 0
  %1847 = vmatpush1.bf16.msra.mxu0 0
  %1848 = vmatprep.mubr.bf16.mxu0 0
  %1849 = vmatmul.mubr.bf16.gmra.mrb[0].mxu0 %v1814
  %v1850 = vpop.f32.mrb[0].mxu0
  %v1851 = vadd.f32 0.0, %v1850
  %v1852 = vpop.f32.mrb[0].mxu0
  %v1853 = vpop.f32.mrb[0].mxu0
  %v1854 = vpop.f32.mrb[0].mxu0
  %1855 = vdwg.mxu0
  %v1857 = vrot.slane %v1851, 2
  %v1859 = vadd.f32 %v230, %v1857
  %v1860 = vmul.f32 %v1859, 0.5
  %v1861 = vtanh.pop %v1860
  %v1862 = vadd.f32 %v1861, 1.0
  %v1863 = vmul.f32 %v1862, 0.5
  %v1865 = vrot.slane %v1725, 6
  %v1867 = vmul.f32 %v1863, %v1865
  %1869 = vrot.lane.b32.xlu0 %v1861, 64
  %v1870 = vpop.permute.xlu0 %1869
  %v1872 = vmul.f32 %v1863, %v1870
  %1874 = vrot.lane.b32.xlu0 %v1872, 32
  %v1875 = vpop.permute.xlu0 %1874
  %v1877 = vadd.f32 %v1867, %v1875
  %v1878 = vtanh.pop %v1877
  %1880 = vrot.lane.b32.xlu0 %v1878, 64
  %v1881 = vpop.permute.xlu0 %1880
  %v1883 = vmul.f32 %v1863, %v1881
  %v1884 = vpack.c.bf16 %v1883, %v1883
  %1885 = vrot.lane.b32.xlu0 %v1732, 32
  %v1886 = vpop.permute.xlu0 %1885
  %v1888 = vrot.slane %v1808, 6
  %1889 = vrot.lane.b32.xlu0 %v1888, 64
  %v1890 = vpop.permute.xlu0 %1889
  %v1893 = vsel %vm143, %v1886, %v1890
  %v1895 = vrot.slane %v1893, 2
  %v1897 = vsel %vm398, %v1895, 0
  %1899 = vmatprep.subr.bf16.mxu0 0
  %1900 = vmatpush1.bf16.msra.mxu0 %v247
  %1901 = vmatprep.subr.bf16.mxu0 0
  %1902 = vmatpush1.bf16.msra.mxu0 %v248
  %1903 = vmatprep.subr.bf16.mxu0 0
  %1904 = vmatpush1.bf16.msra.mxu0 %v249
  %1905 = vmatprep.subr.bf16.mxu0 0
  %1906 = vmatpush1.bf16.msra.mxu0 %v250
  %1907 = vmatprep.subr.bf16.mxu0 0
  %1908 = vmatpush1.bf16.msra.mxu0 0
  %1909 = vmatprep.subr.bf16.mxu0 0
  %1910 = vmatpush1.bf16.msra.mxu0 0
  %1911 = vmatprep.subr.bf16.mxu0 0
  %1912 = vmatpush1.bf16.msra.mxu0 0
  %1913 = vmatprep.subr.bf16.mxu0 0
  %1914 = vmatpush1.bf16.msra.mxu0 0
  %1915 = vmatprep.subr.bf16.mxu0 0
  %1916 = vmatpush1.bf16.msra.mxu0 0
  %1917 = vmatprep.subr.bf16.mxu0 0
  %1918 = vmatpush1.bf16.msra.mxu0 0
  %1919 = vmatprep.subr.bf16.mxu0 0
  %1920 = vmatpush1.bf16.msra.mxu0 0
  %1921 = vmatprep.subr.bf16.mxu0 0
  %1922 = vmatpush1.bf16.msra.mxu0 0
  %1923 = vmatprep.subr.bf16.mxu0 0
  %1924 = vmatpush1.bf16.msra.mxu0 0
  %1925 = vmatprep.subr.bf16.mxu0 0
  %1926 = vmatpush1.bf16.msra.mxu0 0
  %1927 = vmatprep.subr.bf16.mxu0 0
  %1928 = vmatpush1.bf16.msra.mxu0 0
  %1929 = vmatprep.subr.bf16.mxu0 0
  %1930 = vmatpush1.bf16.msra.mxu0 0
  %1931 = vmatprep.mubr.bf16.mxu0 0
  %1932 = vmatmul.mubr.bf16.gmra.mrb[0].mxu0 %v1897
  %v1933 = vpop.f32.mrb[0].mxu0
  %v1934 = vadd.f32 %v397, %v1933
  %v1935 = vpop.f32.mrb[0].mxu0
  %v1936 = vpop.f32.mrb[0].mxu0
  %v1937 = vpop.f32.mrb[0].mxu0
  %1938 = vdwg.mxu0
  %v1939 = vmul.f32 %v1934, 0.5
  %v1940 = vtanh.pop %v1939
  %v1941 = vadd.f32 %v1940, 1.0
  %v1942 = vmul.f32 %v1941, 0.5
  %v1943 = vmul.f32 %v1942, %v1801
  %1945 = vrot.lane.b32.xlu0 %v1940, 64
  %v1946 = vpop.permute.xlu0 %1945
  %v1948 = vmul.f32 %v1942, %v1946
  %1950 = vrot.lane.b32.xlu0 %v1948, 32
  %v1951 = vpop.permute.xlu0 %1950
  %v1953 = vadd.f32 %v1943, %v1951
  %v1954 = vtanh.pop %v1953
  %1956 = vrot.lane.b32.xlu0 %v1954, 64
  %v1957 = vpop.permute.xlu0 %1956
  %v1959 = vmul.f32 %v1942, %v1957
  %v1960 = vpack.c.bf16 %v1959, %v1959
  %1962 = vrot.lane.b32.xlu0 %v1884, 32
  %v1963 = vpop.permute.xlu0 %1962
  %v1965 = vrot.slane %v1960, 5
  %1966 = vrot.lane.b32.xlu0 %v1965, 64
  %v1967 = vpop.permute.xlu0 %1966
  %v1970 = vsel %vm143, %v1963, %v1967
  %v1972 = vrot.slane %v1970, 3
  %v1974 = vsel %vm398, %v1972, 0
  %1976 = vmatprep.subr.bf16.mxu0 0
  %1977 = vmatpush1.bf16.msra.mxu0 %v247
  %1978 = vmatprep.subr.bf16.mxu0 0
  %1979 = vmatpush1.bf16.msra.mxu0 %v248
  %1980 = vmatprep.subr.bf16.mxu0 0
  %1981 = vmatpush1.bf16.msra.mxu0 %v249
  %1982 = vmatprep.subr.bf16.mxu0 0
  %1983 = vmatpush1.bf16.msra.mxu0 %v250
  %1984 = vmatprep.subr.bf16.mxu0 0
  %1985 = vmatpush1.bf16.msra.mxu0 0
  %1986 = vmatprep.subr.bf16.mxu0 0
  %1987 = vmatpush1.bf16.msra.mxu0 0
  %1988 = vmatprep.subr.bf16.mxu0 0
  %1989 = vmatpush1.bf16.msra.mxu0 0
  %1990 = vmatprep.subr.bf16.mxu0 0
  %1991 = vmatpush1.bf16.msra.mxu0 0
  %1992 = vmatprep.subr.bf16.mxu0 0
  %1993 = vmatpush1.bf16.msra.mxu0 0
  %1994 = vmatprep.subr.bf16.mxu0 0
  %1995 = vmatpush1.bf16.msra.mxu0 0
  %1996 = vmatprep.subr.bf16.mxu0 0
  %1997 = vmatpush1.bf16.msra.mxu0 0
  %1998 = vmatprep.subr.bf16.mxu0 0
  %1999 = vmatpush1.bf16.msra.mxu0 0
  %2000 = vmatprep.subr.bf16.mxu0 0
  %2001 = vmatpush1.bf16.msra.mxu0 0
  %2002 = vmatprep.subr.bf16.mxu0 0
  %2003 = vmatpush1.bf16.msra.mxu0 0
  %2004 = vmatprep.subr.bf16.mxu0 0
  %2005 = vmatpush1.bf16.msra.mxu0 0
  %2006 = vmatprep.subr.bf16.mxu0 0
  %2007 = vmatpush1.bf16.msra.mxu0 0
  %2008 = vmatprep.mubr.bf16.mxu0 0
  %2009 = vmatmul.mubr.bf16.gmra.mrb[0].mxu0 %v1974
  %v2010 = vpop.f32.mrb[0].mxu0
  %v2011 = vadd.f32 %v397, %v2010
  %v2012 = vpop.f32.mrb[0].mxu0
  %v2013 = vpop.f32.mrb[0].mxu0
  %v2014 = vpop.f32.mrb[0].mxu0
  %2015 = vdwg.mxu0
  %v2016 = vmul.f32 %v2011, 0.5
  %v2017 = vtanh.pop %v2016
  %v2018 = vadd.f32 %v2017, 1.0
  %v2019 = vmul.f32 %v2018, 0.5
  %v2020 = vmul.f32 %v2019, %v1953
  %2022 = vrot.lane.b32.xlu0 %v2017, 64
  %v2023 = vpop.permute.xlu0 %2022
  %v2025 = vmul.f32 %v2019, %v2023
  %2027 = vrot.lane.b32.xlu0 %v2025, 32
  %v2028 = vpop.permute.xlu0 %2027
  %v2030 = vadd.f32 %v2020, %v2028
  %v2031 = vtanh.pop %v2030
  %2033 = vrot.lane.b32.xlu0 %v2031, 64
  %v2034 = vpop.permute.xlu0 %2033
  %v2036 = vmul.f32 %v2019, %v2034
  %v2038 = vrot.slane %v1210, 6
  %v2041 = vrot.slane %v1362, 4
  %v2044 = vrot.slane %v1511, 2
  %v2047 = vrot.slane %v1807, 6
  %v2050 = vrot.slane %v1959, 4
  %v2053 = vrot.slane %v2036, 2
  %vm2055 = vcmask 1041408
  %v2056 = vsel %vm2055, %v1058, %v2038
  %vm2057 = vcmask 1043456
  %v2058 = vsel %vm2057, %v2056, %v2041
  %vm2059 = vcmask 1045504
  %v2060 = vsel %vm2059, %v2058, %v2044
  %v2061 = vsel %vm2055, %v1655, %v2047
  %v2062 = vsel %vm2057, %v2061, %v2050
  %v2063 = vsel %vm2059, %v2062, %v2053
  %v2064 = vld [vmem:[%s2 + $0x90] sm:$0xff]
  %v2065 = vld [vmem:[%s2 + $0x98] sm:$0xff]
  %v2066 = vld [vmem:[%s2 + $0xa0] sm:$0xff]
  %v2067 = vld [vmem:[%s2 + $0xa8] sm:$0xff]
  %v2068 = vld [vmem:[%s2 + $0xb0] sm:$0x1]
  %v2069 = vlaneseq
  %v2070 = vshrl.u32 %v2069, 7
  %v2071 = vsub.s32 0, %v2070
  %v2072 = vrot.slane %v2068, %v2071
  %2075 = vrot.lane.b32.xlu0 %v2060, 32
  %v2076 = vpop.permute.xlu0 %2075
  %2077 = vrot.lane.b32.xlu0 %v2063, 32
  %v2078 = vpop.permute.xlu0 %2077
  %v2079 = vsel %vm143, %v2076, 0
  %v2081 = vsel %vm143, %v2078, 0
  %2083 = vmatprep.subr.mxu0 0.0
  %2084 = vmatpush1.msra.mxu0 %v2064
  %2085 = vmatprep.subr.mxu0 0.0
  %2086 = vmatpush1.msra.mxu0 %v2065
  %2087 = vmatprep.subr.mxu0 0.0
  %2088 = vmatpush1.msra.mxu0 %v2066
  %2089 = vmatprep.subr.mxu0 0.0
  %2090 = vmatpush1.msra.mxu0 %v2067
  %2091 = vmatprep.subr.mxu0 0.0
  %2092 = vmatpush1.msra.mxu0 0.0
  %2093 = vmatprep.subr.mxu0 0.0
  %2094 = vmatpush1.msra.mxu0 0.0
  %2095 = vmatprep.subr.mxu0 0.0
  %2096 = vmatpush1.msra.mxu0 0.0
  %2097 = vmatprep.subr.mxu0 0.0
  %2098 = vmatpush1.msra.mxu0 0.0
  %2099 = vmatprep.subr.mxu0 0.0
  %2100 = vmatpush1.msra.mxu0 0.0
  %2101 = vmatprep.subr.mxu0 0.0
  %2102 = vmatpush1.msra.mxu0 0.0
  %2103 = vmatprep.subr.mxu0 0.0
  %2104 = vmatpush1.msra.mxu0 0.0
  %2105 = vmatprep.subr.mxu0 0.0
  %2106 = vmatpush1.msra.mxu0 0.0
  %2107 = vmatprep.subr.mxu0 0.0
  %2108 = vmatpush1.msra.mxu0 0.0
  %2109 = vmatprep.subr.mxu0 0.0
  %2110 = vmatpush1.msra.mxu0 0.0
  %2111 = vmatprep.subr.mxu0 0.0
  %2112 = vmatpush1.msra.mxu0 0.0
  %2113 = vmatprep.subr.mxu0 0.0
  %2114 = vmatpush1.msra.mxu0 0.0
  %2115 = vmatprep.subr.mxu0 0.0
  %2116 = vmatpush1.msra.mxu0 0.0
  %2117 = vmatprep.subr.mxu0 0.0
  %2118 = vmatpush1.msra.mxu0 0.0
  %2119 = vmatprep.subr.mxu0 0.0
  %2120 = vmatpush1.msra.mxu0 0.0
  %2121 = vmatprep.subr.mxu0 0.0
  %2122 = vmatpush1.msra.mxu0 0.0
  %2123 = vmatprep.subr.mxu0 0.0
  %2124 = vmatpush1.msra.mxu0 0.0
  %2125 = vmatprep.subr.mxu0 0.0
  %2126 = vmatpush1.msra.mxu0 0.0
  %2127 = vmatprep.subr.mxu0 0.0
  %2128 = vmatpush1.msra.mxu0 0.0
  %2129 = vmatprep.subr.mxu0 0.0
  %2130 = vmatpush1.msra.mxu0 0.0
  %2131 = vmatprep.subr.mxu0 0.0
  %2132 = vmatpush1.msra.mxu0 0.0
  %2133 = vmatprep.subr.mxu0 0.0
  %2134 = vmatpush1.msra.mxu0 0.0
  %2135 = vmatprep.subr.mxu0 0.0
  %2136 = vmatpush1.msra.mxu0 0.0
  %2137 = vmatprep.subr.mxu0 0.0
  %2138 = vmatpush1.msra.mxu0 0.0
  %2139 = vmatprep.subr.mxu0 0.0
  %2140 = vmatpush1.msra.mxu0 0.0
  %2141 = vmatprep.subr.mxu0 0.0
  %2142 = vmatpush1.msra.mxu0 0.0
  %2143 = vmatprep.subr.mxu0 0.0
  %2144 = vmatpush1.msra.mxu0 0.0
  %2145 = vmatprep.subr.mxu0 0.0
  %2146 = vmatpush1.msra.mxu0 0.0
  %2147 = vmatprep.mubr.f32.mxu0 0.0
  %2148 = vmatmul.mubr.f32.gmra.mrb[0].mxu0 %v2079
  %v2149 = vpop.f32.mrb[0].mxu0
  %v2150 = vadd.f32 %v2072, %v2149
  %v2151 = vpop.f32.mrb[0].mxu0
  %2152 = vmatprep.mubr.f32.mxu0 0.0
  %2153 = vmatmul.mubr.f32.gmra.mrb[0].mxu0 %v2081
  %v2154 = vpop.f32.mrb[0].mxu0
  %v2155 = vadd.f32 %v2072, %v2154
  %v2156 = vpop.f32.mrb[0].mxu0
  %2157 = vdwg.mxu0
  %2158 = vst [vmem:[%s3] sm:$0xff] %v2150
  %2159 = vst [vmem:[%s3 + $0x8] sm:$0xff] %v2155
  // Predicated region
  $region14: #{lstm_model_forward.1} parent=0 // pred_check
    _
  $region15: #{lstm_model_forward.1} parent=0 // pred_check_branch
    %2161 = sbr.rel (0) target = $region17
  $region16: #{lstm_model_forward.1} parent=0 // pred_region
    _
  $region17: #{lstm_model_forward.1} parent=0 // pred_fallthru
    _
  // Predicated region
  $region18: #{lstm_model_forward.1} parent=0 // pred_check
    _
  $region19: #{lstm_model_forward.1} parent=0 // pred_check_branch
    %2163 = sbr.rel (0) target = $region21
  $region20: #{lstm_model_forward.1} parent=0 // pred_region
    _
  $region21: #{lstm_model_forward.1} parent=0 // pred_fallthru
    _

</llo_original>
